<compile_context>
chip_gen: v7x
topology: tpu7x:2x2x1
jax: 0.10.0
libtpu: 0.0.40
codegen_flags: <defaults>
</compile_context>

<pallas_src>
import functools
import math

import jax
import jax.numpy as jnp
import numpy as np
from jax import lax
from jax.experimental import pallas as pl
from jax.experimental.pallas import tpu as pltpu


# MXU operand dtype (accumulation is always f32).  bfloat16 halves MXU-input bytes and
# uses the fast MXU path on v6e/v7x; use jnp.float32 for bit-tight parity with PyTorch.
MXU_DTYPE = jnp.bfloat16


# ----------------------------------------------------------------------------- kernel

def convnet_kernel(x4_ref, m1_ref, b1t_ref, m2_ref, b2t_ref,
                   w1p_ref, b1r_ref, w2p_ref, b2r_ref, o_ref):
    """Whole ConvNet forward for one batch tile (nb samples), fully VMEM-resident.

    x4_ref : (nb, 4, 7, 28)  input rows regrouped mod 4: x4[n, j, U, w] = x[n, 4U+j, w]
    m1_ref : (140, 240)      conv1 block-Toeplitz matrix, rows (kh, w), cols (s, b, c)
    b1t_ref: (1, 120)        conv1 bias tiled over b (col = b*10 + c)
    m2_ref : (600, 160)      conv2 block-Toeplitz matrix, rows (kh, b, ci), cols (s', b', c')
    b2t_ref: (1, 80)         conv2 bias tiled over b' (col = b'*20 + c')
    w1p_ref: (320, 50)       fc1 weights, input columns permuted to our flatten order
    b1r_ref: (1, 50)
    w2p_ref: (50, 10)
    b2r_ref: (1, 10)
    o_ref  : (nb, 10)        log-softmax output
    """
    nb = x4_ref.shape[0]
    x4 = x4_ref[...]                                            # (nb, 4, 7, 28) f32

    # ---- conv1 (5x5, 1->10) + bias + 2x2 maxpool + relu, one GEMM -----------------
    # Conv-output row i = 4u + 2*rho + r (r = pool offset, rho = parity of pooled row,
    # u in [0,6)); the W taps / W pooling / channels live in M1's columns.
    row_blocks = []
    for rho in (0, 1):
        for r in (0, 1):
            taps = []
            for kh in range(5):
                t = 2 * rho + r + kh                            # input row = 4u + t
                taps.append(x4[:, t % 4, t // 4:t // 4 + 6, :])  # (nb, 6, 28)
            row_blocks.append(jnp.concatenate(taps, axis=-1))   # (nb, 6, 140) cols (kh, w)
    lhs1 = jnp.concatenate(row_blocks, axis=1)                  # (nb, 24, 140)
    c1 = jnp.dot(lhs1.reshape(nb * 24, 140).astype(MXU_DTYPE), m1_ref[...],
                 preferred_element_type=jnp.float32)            # (nb*24, 240)
    c1 = c1.reshape(nb, 24, 240)                                # rows (block=2rho+r, u)

    a1 = []                                                     # a1[rho]: (nb, 6, 120)
    for rho in (0, 1):
        blk = jnp.maximum(c1[:, 12 * rho:12 * rho + 6, :],      # max over r (H pool)
                          c1[:, 12 * rho + 6:12 * rho + 12, :])
        blk = jnp.maximum(blk[:, :, :120], blk[:, :, 120:])     # max over s (W pool)
        a1.append(jnp.maximum(blk + b1t_ref[...], 0.0))         # bias + relu (f32 VPU)
    # a1[rho][n, u, b*10+c] = relu(pool(conv1))[n, c, 2u+rho, b]

    # ---- conv2 (5x5, 10->20) + bias + 2x2 maxpool + relu, one GEMM ----------------
    rblocks = []
    for rp in (0, 1):                                           # conv2-output row parity
        taps = []
        for kh in range(5):
            t = rp + kh                                         # input row p = 2a' + t
            taps.append(a1[t % 2][:, t // 2:t // 2 + 4, :])     # (nb, 4, 120)
        rblocks.append(jnp.concatenate(taps, axis=-1))          # (nb, 4, 600) cols (kh,b,ci)
    lhs2 = jnp.concatenate(rblocks, axis=1)                     # (nb, 8, 600)
    c2 = jnp.dot(lhs2.reshape(nb * 8, 600).astype(MXU_DTYPE), m2_ref[...],
                 preferred_element_type=jnp.float32)            # (nb*8, 160)
    c2 = c2.reshape(nb, 8, 160)

    blk = jnp.maximum(c2[:, 0:4, :], c2[:, 4:8, :])             # max over r' (H pool)
    blk = jnp.maximum(blk[:, :, :80], blk[:, :, 80:])           # max over s' (W pool)
    a2 = jnp.maximum(blk + b2t_ref[...], 0.0)                   # (nb, 4, 80)
    # a2[n, a', b'*20+c'] = relu(pool(conv2))[n, c', a', b']

    # TODO(synk): Dropout2d / F.dropout are identity in eval mode; training-mode
    #             masking (pltpu.prng_*) is not implemented.

    # ---- flatten + fc1 + relu + fc2 + log_softmax ----------------------------------
    flat = jnp.concatenate([a2[:, g, :] for g in range(4)], axis=-1)   # (nb, 320)
    h = jnp.dot(flat.astype(MXU_DTYPE), w1p_ref[...],
                preferred_element_type=jnp.float32) + b1r_ref[...]
    h = jnp.maximum(h, 0.0)
    z = jnp.dot(h.astype(MXU_DTYPE), w2p_ref[...],
                preferred_element_type=jnp.float32) + b2r_ref[...]     # (nb, 10)
    m = jnp.max(z, axis=-1, keepdims=True)
    e = jnp.exp(z - m)
    o_ref[...] = z - (jnp.log(jnp.sum(e, axis=-1, keepdims=True)) + m)


# ----------------------------------------------------------------------------- params

def init_params(key):
    ks = jax.random.split(key, 8)

    def u(k, shape, fan_in):
        bound = 1.0 / math.sqrt(fan_in)
        return jax.random.uniform(k, shape, jnp.float32, -bound, bound)

    # PyTorch parameter shapes/layouts.
    return dict(
        conv1_w=u(ks[0], (10, 1, 5, 5), 1 * 5 * 5),
        conv1_b=u(ks[1], (10,), 1 * 5 * 5),
        conv2_w=u(ks[2], (20, 10, 5, 5), 10 * 5 * 5),
        conv2_b=u(ks[3], (20,), 10 * 5 * 5),
        fc1_w=u(ks[4], (50, 320), 320),
        fc1_b=u(ks[5], (50,), 320),
        fc2_w=u(ks[6], (10, 50), 50),
        fc2_b=u(ks[7], (10,), 50),
    )


def prepare_params(params):
    """One-time (host) conversion of PyTorch-layout params into the structured GEMM
    matrices the fused kernel consumes.  Total size ~300 KB -> trivially VMEM resident."""
    w1 = np.asarray(params["conv1_w"], np.float32)     # (10, 1, 5, 5)  OIHW
    b1 = np.asarray(params["conv1_b"], np.float32)
    w2 = np.asarray(params["conv2_w"], np.float32)     # (20, 10, 5, 5)
    b2 = np.asarray(params["conv2_b"], np.float32)
    fc1_w = np.asarray(params["fc1_w"], np.float32)    # (50, 320)
    fc1_b = np.asarray(params["fc1_b"], np.float32)
    fc2_w = np.asarray(params["fc2_w"], np.float32)    # (10, 50)
    fc2_b = np.asarray(params["fc2_b"], np.float32)

    # M1 (140, 240): rows (kh, w in [0,28)); cols (s in {0,1}, b in [0,12), c in [0,10)).
    # M1[kh*28 + w, s*120 + b*10 + c] = w1[c, 0, kh, kw] with kw = w - (2b + s).
    m1 = np.zeros((5 * 28, 2 * 12 * 10), np.float32)
    for kh in range(5):
        for s in range(2):
            for b in range(12):
                for kw in range(5):
                    w = 2 * b + s + kw
                    m1[kh * 28 + w, s * 120 + b * 10:s * 120 + b * 10 + 10] = w1[:, 0, kh, kw]
    b1t = np.tile(b1, 12)[None, :]                     # (1, 120), col = b*10 + c

    # M2 (600, 160): rows (kh, b in [0,12), ci in [0,10)); cols (s', b' in [0,4), c' in [0,20)).
    # M2[kh*120 + b*10 + ci, s'*80 + b'*20 + c'] = w2[c', ci, kh, kw] with kw = b - (2b' + s').
    m2 = np.zeros((5 * 120, 2 * 4 * 20), np.float32)
    for kh in range(5):
        for sp in range(2):
            for bp in range(4):
                for kw in range(5):
                    b = 2 * bp + sp + kw
                    for ci in range(10):
                        m2[kh * 120 + b * 10 + ci,
                           sp * 80 + bp * 20:sp * 80 + bp * 20 + 20] = w2[:, ci, kh, kw]
    b2t = np.tile(b2, 4)[None, :]                      # (1, 80), col = b'*20 + c'

    # fc1: kernel flatten order is col = a'*80 + b'*20 + c'; PyTorch NCHW flatten is
    # f = c'*16 + a'*4 + b'.  Permute fc1's input columns once, here.
    perm = np.zeros(320, np.int64)
    for ap in range(4):
        for bp in range(4):
            for cp in range(20):
                perm[ap * 80 + bp * 20 + cp] = cp * 16 + ap * 4 + bp
    w1p = fc1_w[:, perm].T                             # (320, 50)
    w2p = fc2_w.T                                      # (50, 10)

    return dict(
        m1=jnp.asarray(m1, MXU_DTYPE),
        b1t=jnp.asarray(b1t, jnp.float32),
        m2=jnp.asarray(m2, MXU_DTYPE),
        b2t=jnp.asarray(b2t, jnp.float32),
        w1p=jnp.asarray(w1p, MXU_DTYPE),
        b1r=jnp.asarray(fc1_b[None, :], jnp.float32),
        w2p=jnp.asarray(w2p, MXU_DTYPE),
        b2r=jnp.asarray(fc2_b[None, :], jnp.float32),
    )


# ----------------------------------------------------------------------------- forward

@functools.partial(jax.jit, static_argnames=("batch_tile",))
def convnet_forward(prep, x_nchw, batch_tile=64):
    """Full forward pass: ONE pallas_call, grid tiled over the batch ('parallel')."""
    n = x_nchw.shape[0]
    nb = min(batch_tile, n)
    n_tiles = -(-n // nb)
    npad = n_tiles * nb

    xs = x_nchw.reshape(n, 28, 28).astype(jnp.float32)
    if npad != n:
        xs = jnp.pad(xs, ((0, npad - n), (0, 0), (0, 0)))
    # Regroup image rows mod 4 (raw byte count, NOT an im2col): x4[n, j, U, w] = x[n, 4U+j, w].
    x4 = xs.reshape(npad, 7, 4, 28).transpose(0, 2, 1, 3)        # (npad, 4, 7, 28)

    flops = npad * (2 * 24 * 140 * 240 + 2 * 8 * 600 * 160 + 2 * 320 * 50 + 2 * 50 * 10)
    bytes_in = int(x4.size) * 4 + sum(int(v.size) * v.dtype.itemsize for v in prep.values())
    cost = pl.CostEstimate(flops=int(flops), transcendentals=int(npad * 11),
                           bytes_accessed=int(bytes_in + npad * 10 * 4))

    out = pl.pallas_call(
        convnet_kernel,
        out_shape=jax.ShapeDtypeStruct((npad, 10), jnp.float32),
        grid=(n_tiles,),
        in_specs=[
            pl.BlockSpec((nb, 4, 7, 28), lambda i: (i, 0, 0, 0)),
            pl.BlockSpec(prep["m1"].shape, lambda i: (0, 0)),
            pl.BlockSpec(prep["b1t"].shape, lambda i: (0, 0)),
            pl.BlockSpec(prep["m2"].shape, lambda i: (0, 0)),
            pl.BlockSpec(prep["b2t"].shape, lambda i: (0, 0)),
            pl.BlockSpec(prep["w1p"].shape, lambda i: (0, 0)),
            pl.BlockSpec(prep["b1r"].shape, lambda i: (0, 0)),
            pl.BlockSpec(prep["w2p"].shape, lambda i: (0, 0)),
            pl.BlockSpec(prep["b2r"].shape, lambda i: (0, 0)),
        ],
        out_specs=pl.BlockSpec((nb, 10), lambda i: (i, 0)),
        compiler_params=pltpu.CompilerParams(
            dimension_semantics=("parallel",),          # batch tiles are independent
            vmem_limit_bytes=32 * 1024 * 1024,          # safe on v5e/v6e/v7x (<=32 MiB used)
        ),
        cost_estimate=cost,
    )(x4, prep["m1"], prep["b1t"], prep["m2"], prep["b2t"],
      prep["w1p"], prep["b1r"], prep["w2p"], prep["b2r"])
    return out[:n]


# ----------------------------------------------------------------------------- pure-JAX reference

def reference_forward(params, x):
    dn = ("NCHW", "OIHW", "NCHW")
    y = lax.conv_general_dilated(x, params["conv1_w"], (1, 1), "VALID",
                                 dimension_numbers=dn) + params["conv1_b"][None, :, None, None]
    y = lax.reduce_window(y, -jnp.inf, lax.max, (1, 1, 2, 2), (1, 1, 2, 2), "VALID")
    y = jnp.maximum(y, 0.0)
    y = lax.conv_general_dilated(y, params["conv2_w"], (1, 1), "VALID",
                                 dimension_numbers=dn) + params["conv2_b"][None, :, None, None]
    y = lax.reduce_window(y, -jnp.inf, lax.max, (1, 1, 2, 2), (1, 1, 2, 2), "VALID")
    y = jnp.maximum(y, 0.0)
    y = y.reshape(y.shape[0], -1)
    y = jnp.maximum(y @ params["fc1_w"].T + params["fc1_b"], 0.0)
    y = y @ params["fc2_w"].T + params["fc2_b"]
    return jax.nn.log_softmax(y, axis=1)


# ----------------------------------------------------------------------------- main

if __name__ == "__main__":
    key = jax.random.PRNGKey(0)
    pkey, xkey = jax.random.split(key)
    params = init_params(pkey)
    prep = prepare_params(params)

    # Input: batch=2, 1 channel, 28x28 (28 forced by fc1 expecting 20*4*4=320 features).
    x = jax.random.normal(xkey, (2, 1, 28, 28), dtype=jnp.float32)

    out = jax.block_until_ready(convnet_forward(prep, x))
    ref = jax.block_until_ready(reference_forward(params, x))

    assert out.shape == (2, 10), out.shape
    if MXU_DTYPE == jnp.bfloat16:
        atol = rtol = 3e-2       # bf16 MXU operands (f32 accumulate / f32 elementwise)
    else:
        atol = rtol = 1e-4
    np.testing.assert_allclose(np.asarray(out), np.asarray(ref), atol=atol, rtol=rtol)

    print("KERNEL_OK")
</pallas_src>

<mosaic_0001>
module attributes {stable_mosaic.version = 11 : i64} {
  func.func @convnet_kernel(%arg0: i32, %arg1: memref<2x4x7x28xf32, #tpu.memory_space<vmem>>, %arg2: memref<140x240xbf16, #tpu.memory_space<vmem>>, %arg3: memref<1x120xf32, #tpu.memory_space<vmem>>, %arg4: memref<600x160xbf16, #tpu.memory_space<vmem>>, %arg5: memref<1x80xf32, #tpu.memory_space<vmem>>, %arg6: memref<320x50xbf16, #tpu.memory_space<vmem>>, %arg7: memref<1x50xf32, #tpu.memory_space<vmem>>, %arg8: memref<50x10xbf16, #tpu.memory_space<vmem>>, %arg9: memref<1x10xf32, #tpu.memory_space<vmem>>, %arg10: memref<2x10xf32, #tpu.memory_space<vmem>>) attributes {dimension_semantics = [#tpu.dimension_semantics<parallel>], iteration_bounds = array<i64: 1>, scalar_prefetch = 0 : i64, scratch_operands = 0 : i64, tpu.core_type = #tpu.core_type<tc>, window_params = [{transform_indices = @transform_0, window_bounds = array<i64: 2, 4, 7, 28>}, {pipeline_mode = #tpu.pipeline_mode<synchronous>, transform_indices = @transform_1, window_bounds = array<i64: 140, 240>}, {pipeline_mode = #tpu.pipeline_mode<synchronous>, transform_indices = @transform_2, window_bounds = array<i64: 1, 120>}, {pipeline_mode = #tpu.pipeline_mode<synchronous>, transform_indices = @transform_3, window_bounds = array<i64: 600, 160>}, {pipeline_mode = #tpu.pipeline_mode<synchronous>, transform_indices = @transform_4, window_bounds = array<i64: 1, 80>}, {pipeline_mode = #tpu.pipeline_mode<synchronous>, transform_indices = @transform_5, window_bounds = array<i64: 320, 50>}, {pipeline_mode = #tpu.pipeline_mode<synchronous>, transform_indices = @transform_6, window_bounds = array<i64: 1, 50>}, {pipeline_mode = #tpu.pipeline_mode<synchronous>, transform_indices = @transform_7, window_bounds = array<i64: 50, 10>}, {pipeline_mode = #tpu.pipeline_mode<synchronous>, transform_indices = @transform_8, window_bounds = array<i64: 1, 10>}, {transform_indices = @transform_9, window_bounds = array<i64: 2, 10>}]} {
    %c0 = arith.constant 0 : index
    %c0_0 = arith.constant 0 : index
    %c0_1 = arith.constant 0 : index
    %c0_2 = arith.constant 0 : index
    %0 = vector.load %arg1[%c0, %c0_0, %c0_1, %c0_2] : memref<2x4x7x28xf32, #tpu.memory_space<vmem>>, vector<2x4x7x28xf32>
    %1 = vector.extract_strided_slice %0 {offsets = [0, 0, 0, 0], sizes = [2, 1, 6, 28], strides = [1, 1, 1, 1]} : vector<2x4x7x28xf32> to vector<2x1x6x28xf32>
    %2 = vector.shape_cast %1 : vector<2x1x6x28xf32> to vector<2x6x28xf32>
    %3 = vector.extract_strided_slice %0 {offsets = [0, 1, 0, 0], sizes = [2, 1, 6, 28], strides = [1, 1, 1, 1]} : vector<2x4x7x28xf32> to vector<2x1x6x28xf32>
    %4 = vector.shape_cast %3 : vector<2x1x6x28xf32> to vector<2x6x28xf32>
    %5 = vector.extract_strided_slice %0 {offsets = [0, 2, 0, 0], sizes = [2, 1, 6, 28], strides = [1, 1, 1, 1]} : vector<2x4x7x28xf32> to vector<2x1x6x28xf32>
    %6 = vector.shape_cast %5 : vector<2x1x6x28xf32> to vector<2x6x28xf32>
    %7 = vector.extract_strided_slice %0 {offsets = [0, 3, 0, 0], sizes = [2, 1, 6, 28], strides = [1, 1, 1, 1]} : vector<2x4x7x28xf32> to vector<2x1x6x28xf32>
    %8 = vector.shape_cast %7 : vector<2x1x6x28xf32> to vector<2x6x28xf32>
    %9 = vector.extract_strided_slice %0 {offsets = [0, 0, 1, 0], sizes = [2, 1, 6, 28], strides = [1, 1, 1, 1]} : vector<2x4x7x28xf32> to vector<2x1x6x28xf32>
    %10 = vector.shape_cast %9 : vector<2x1x6x28xf32> to vector<2x6x28xf32>
    %11 = tpu.concatenate %2, %4, %6, %8, %10 in 2 : vector<2x6x28xf32>, vector<2x6x28xf32>, vector<2x6x28xf32>, vector<2x6x28xf32>, vector<2x6x28xf32> -> vector<2x6x140xf32>
    %12 = vector.extract_strided_slice %0 {offsets = [0, 1, 0, 0], sizes = [2, 1, 6, 28], strides = [1, 1, 1, 1]} : vector<2x4x7x28xf32> to vector<2x1x6x28xf32>
    %13 = vector.shape_cast %12 : vector<2x1x6x28xf32> to vector<2x6x28xf32>
    %14 = vector.extract_strided_slice %0 {offsets = [0, 2, 0, 0], sizes = [2, 1, 6, 28], strides = [1, 1, 1, 1]} : vector<2x4x7x28xf32> to vector<2x1x6x28xf32>
    %15 = vector.shape_cast %14 : vector<2x1x6x28xf32> to vector<2x6x28xf32>
    %16 = vector.extract_strided_slice %0 {offsets = [0, 3, 0, 0], sizes = [2, 1, 6, 28], strides = [1, 1, 1, 1]} : vector<2x4x7x28xf32> to vector<2x1x6x28xf32>
    %17 = vector.shape_cast %16 : vector<2x1x6x28xf32> to vector<2x6x28xf32>
    %18 = vector.extract_strided_slice %0 {offsets = [0, 0, 1, 0], sizes = [2, 1, 6, 28], strides = [1, 1, 1, 1]} : vector<2x4x7x28xf32> to vector<2x1x6x28xf32>
    %19 = vector.shape_cast %18 : vector<2x1x6x28xf32> to vector<2x6x28xf32>
    %20 = vector.extract_strided_slice %0 {offsets = [0, 1, 1, 0], sizes = [2, 1, 6, 28], strides = [1, 1, 1, 1]} : vector<2x4x7x28xf32> to vector<2x1x6x28xf32>
    %21 = vector.shape_cast %20 : vector<2x1x6x28xf32> to vector<2x6x28xf32>
    %22 = tpu.concatenate %13, %15, %17, %19, %21 in 2 : vector<2x6x28xf32>, vector<2x6x28xf32>, vector<2x6x28xf32>, vector<2x6x28xf32>, vector<2x6x28xf32> -> vector<2x6x140xf32>
    %23 = vector.extract_strided_slice %0 {offsets = [0, 2, 0, 0], sizes = [2, 1, 6, 28], strides = [1, 1, 1, 1]} : vector<2x4x7x28xf32> to vector<2x1x6x28xf32>
    %24 = vector.shape_cast %23 : vector<2x1x6x28xf32> to vector<2x6x28xf32>
    %25 = vector.extract_strided_slice %0 {offsets = [0, 3, 0, 0], sizes = [2, 1, 6, 28], strides = [1, 1, 1, 1]} : vector<2x4x7x28xf32> to vector<2x1x6x28xf32>
    %26 = vector.shape_cast %25 : vector<2x1x6x28xf32> to vector<2x6x28xf32>
    %27 = vector.extract_strided_slice %0 {offsets = [0, 0, 1, 0], sizes = [2, 1, 6, 28], strides = [1, 1, 1, 1]} : vector<2x4x7x28xf32> to vector<2x1x6x28xf32>
    %28 = vector.shape_cast %27 : vector<2x1x6x28xf32> to vector<2x6x28xf32>
    %29 = vector.extract_strided_slice %0 {offsets = [0, 1, 1, 0], sizes = [2, 1, 6, 28], strides = [1, 1, 1, 1]} : vector<2x4x7x28xf32> to vector<2x1x6x28xf32>
    %30 = vector.shape_cast %29 : vector<2x1x6x28xf32> to vector<2x6x28xf32>
    %31 = vector.extract_strided_slice %0 {offsets = [0, 2, 1, 0], sizes = [2, 1, 6, 28], strides = [1, 1, 1, 1]} : vector<2x4x7x28xf32> to vector<2x1x6x28xf32>
    %32 = vector.shape_cast %31 : vector<2x1x6x28xf32> to vector<2x6x28xf32>
    %33 = tpu.concatenate %24, %26, %28, %30, %32 in 2 : vector<2x6x28xf32>, vector<2x6x28xf32>, vector<2x6x28xf32>, vector<2x6x28xf32>, vector<2x6x28xf32> -> vector<2x6x140xf32>
    %34 = vector.extract_strided_slice %0 {offsets = [0, 3, 0, 0], sizes = [2, 1, 6, 28], strides = [1, 1, 1, 1]} : vector<2x4x7x28xf32> to vector<2x1x6x28xf32>
    %35 = vector.shape_cast %34 : vector<2x1x6x28xf32> to vector<2x6x28xf32>
    %36 = vector.extract_strided_slice %0 {offsets = [0, 0, 1, 0], sizes = [2, 1, 6, 28], strides = [1, 1, 1, 1]} : vector<2x4x7x28xf32> to vector<2x1x6x28xf32>
    %37 = vector.shape_cast %36 : vector<2x1x6x28xf32> to vector<2x6x28xf32>
    %38 = vector.extract_strided_slice %0 {offsets = [0, 1, 1, 0], sizes = [2, 1, 6, 28], strides = [1, 1, 1, 1]} : vector<2x4x7x28xf32> to vector<2x1x6x28xf32>
    %39 = vector.shape_cast %38 : vector<2x1x6x28xf32> to vector<2x6x28xf32>
    %40 = vector.extract_strided_slice %0 {offsets = [0, 2, 1, 0], sizes = [2, 1, 6, 28], strides = [1, 1, 1, 1]} : vector<2x4x7x28xf32> to vector<2x1x6x28xf32>
    %41 = vector.shape_cast %40 : vector<2x1x6x28xf32> to vector<2x6x28xf32>
    %42 = vector.extract_strided_slice %0 {offsets = [0, 3, 1, 0], sizes = [2, 1, 6, 28], strides = [1, 1, 1, 1]} : vector<2x4x7x28xf32> to vector<2x1x6x28xf32>
    %43 = vector.shape_cast %42 : vector<2x1x6x28xf32> to vector<2x6x28xf32>
    %44 = tpu.concatenate %35, %37, %39, %41, %43 in 2 : vector<2x6x28xf32>, vector<2x6x28xf32>, vector<2x6x28xf32>, vector<2x6x28xf32>, vector<2x6x28xf32> -> vector<2x6x140xf32>
    %45 = tpu.concatenate %11, %22, %33, %44 in 1 : vector<2x6x140xf32>, vector<2x6x140xf32>, vector<2x6x140xf32>, vector<2x6x140xf32> -> vector<2x24x140xf32>
    %46 = vector.shape_cast %45 : vector<2x24x140xf32> to vector<48x140xf32>
    %47 = arith.truncf %46 : vector<48x140xf32> to vector<48x140xbf16>
    %c0_3 = arith.constant 0 : index
    %c0_4 = arith.constant 0 : index
    %48 = vector.load %arg2[%c0_3, %c0_4] : memref<140x240xbf16, #tpu.memory_space<vmem>>, vector<140x240xbf16>
    %cst = arith.constant dense<0.000000e+00> : vector<48x240xf32>
    %49 = tpu.matmul %47, %48, %cst {dimension_numbers = #tpu.dot_dimension_numbers<[1], [0], [0], [1], [0, 0, 1, 1], [], []>} : vector<48x140xbf16>, vector<140x240xbf16>, vector<48x240xf32> -> vector<48x240xf32>
    %50 = vector.shape_cast %49 : vector<48x240xf32> to vector<2x24x240xf32>
    %51 = vector.extract_strided_slice %50 {offsets = [0, 0, 0], sizes = [2, 6, 240], strides = [1, 1, 1]} : vector<2x24x240xf32> to vector<2x6x240xf32>
    %52 = vector.extract_strided_slice %50 {offsets = [0, 6, 0], sizes = [2, 6, 240], strides = [1, 1, 1]} : vector<2x24x240xf32> to vector<2x6x240xf32>
    %53 = arith.maximumf %51, %52 : vector<2x6x240xf32>
    %54 = vector.extract_strided_slice %53 {offsets = [0, 0, 0], sizes = [2, 6, 120], strides = [1, 1, 1]} : vector<2x6x240xf32> to vector<2x6x120xf32>
    %55 = vector.extract_strided_slice %53 {offsets = [0, 0, 120], sizes = [2, 6, 120], strides = [1, 1, 1]} : vector<2x6x240xf32> to vector<2x6x120xf32>
    %56 = arith.maximumf %54, %55 : vector<2x6x120xf32>
    %c0_5 = arith.constant 0 : index
    %c0_6 = arith.constant 0 : index
    %57 = vector.load %arg3[%c0_5, %c0_6] : memref<1x120xf32, #tpu.memory_space<vmem>>, vector<1x120xf32>
    %58 = vector.shape_cast %57 : vector<1x120xf32> to vector<1x1x120xf32>
    %59 = vector.broadcast %58 : vector<1x1x120xf32> to vector<2x6x120xf32>
    %60 = arith.addf %56, %59 : vector<2x6x120xf32>
    %cst_7 = arith.constant 0.000000e+00 : f32
    %61 = vector.broadcast %cst_7 : f32 to vector<2x6x120xf32>
    %62 = arith.maximumf %60, %61 : vector<2x6x120xf32>
    %63 = vector.extract_strided_slice %50 {offsets = [0, 12, 0], sizes = [2, 6, 240], strides = [1, 1, 1]} : vector<2x24x240xf32> to vector<2x6x240xf32>
    %64 = vector.extract_strided_slice %50 {offsets = [0, 18, 0], sizes = [2, 6, 240], strides = [1, 1, 1]} : vector<2x24x240xf32> to vector<2x6x240xf32>
    %65 = arith.maximumf %63, %64 : vector<2x6x240xf32>
    %66 = vector.extract_strided_slice %65 {offsets = [0, 0, 0], sizes = [2, 6, 120], strides = [1, 1, 1]} : vector<2x6x240xf32> to vector<2x6x120xf32>
    %67 = vector.extract_strided_slice %65 {offsets = [0, 0, 120], sizes = [2, 6, 120], strides = [1, 1, 1]} : vector<2x6x240xf32> to vector<2x6x120xf32>
    %68 = arith.maximumf %66, %67 : vector<2x6x120xf32>
    %c0_8 = arith.constant 0 : index
    %c0_9 = arith.constant 0 : index
    %69 = vector.load %arg3[%c0_8, %c0_9] : memref<1x120xf32, #tpu.memory_space<vmem>>, vector<1x120xf32>
    %70 = vector.shape_cast %69 : vector<1x120xf32> to vector<1x1x120xf32>
    %71 = vector.broadcast %70 : vector<1x1x120xf32> to vector<2x6x120xf32>
    %72 = arith.addf %68, %71 : vector<2x6x120xf32>
    %cst_10 = arith.constant 0.000000e+00 : f32
    %73 = vector.broadcast %cst_10 : f32 to vector<2x6x120xf32>
    %74 = arith.maximumf %72, %73 : vector<2x6x120xf32>
    %75 = vector.extract_strided_slice %62 {offsets = [0, 0, 0], sizes = [2, 4, 120], strides = [1, 1, 1]} : vector<2x6x120xf32> to vector<2x4x120xf32>
    %76 = vector.extract_strided_slice %74 {offsets = [0, 0, 0], sizes = [2, 4, 120], strides = [1, 1, 1]} : vector<2x6x120xf32> to vector<2x4x120xf32>
    %77 = vector.extract_strided_slice %62 {offsets = [0, 1, 0], sizes = [2, 4, 120], strides = [1, 1, 1]} : vector<2x6x120xf32> to vector<2x4x120xf32>
    %78 = vector.extract_strided_slice %74 {offsets = [0, 1, 0], sizes = [2, 4, 120], strides = [1, 1, 1]} : vector<2x6x120xf32> to vector<2x4x120xf32>
    %79 = vector.extract_strided_slice %62 {offsets = [0, 2, 0], sizes = [2, 4, 120], strides = [1, 1, 1]} : vector<2x6x120xf32> to vector<2x4x120xf32>
    %80 = tpu.concatenate %75, %76, %77, %78, %79 in 2 : vector<2x4x120xf32>, vector<2x4x120xf32>, vector<2x4x120xf32>, vector<2x4x120xf32>, vector<2x4x120xf32> -> vector<2x4x600xf32>
    %81 = vector.extract_strided_slice %74 {offsets = [0, 0, 0], sizes = [2, 4, 120], strides = [1, 1, 1]} : vector<2x6x120xf32> to vector<2x4x120xf32>
    %82 = vector.extract_strided_slice %62 {offsets = [0, 1, 0], sizes = [2, 4, 120], strides = [1, 1, 1]} : vector<2x6x120xf32> to vector<2x4x120xf32>
    %83 = vector.extract_strided_slice %74 {offsets = [0, 1, 0], sizes = [2, 4, 120], strides = [1, 1, 1]} : vector<2x6x120xf32> to vector<2x4x120xf32>
    %84 = vector.extract_strided_slice %62 {offsets = [0, 2, 0], sizes = [2, 4, 120], strides = [1, 1, 1]} : vector<2x6x120xf32> to vector<2x4x120xf32>
    %85 = vector.extract_strided_slice %74 {offsets = [0, 2, 0], sizes = [2, 4, 120], strides = [1, 1, 1]} : vector<2x6x120xf32> to vector<2x4x120xf32>
    %86 = tpu.concatenate %81, %82, %83, %84, %85 in 2 : vector<2x4x120xf32>, vector<2x4x120xf32>, vector<2x4x120xf32>, vector<2x4x120xf32>, vector<2x4x120xf32> -> vector<2x4x600xf32>
    %87 = tpu.concatenate %80, %86 in 1 : vector<2x4x600xf32>, vector<2x4x600xf32> -> vector<2x8x600xf32>
    %88 = vector.shape_cast %87 : vector<2x8x600xf32> to vector<16x600xf32>
    %89 = arith.truncf %88 : vector<16x600xf32> to vector<16x600xbf16>
    %c0_11 = arith.constant 0 : index
    %c0_12 = arith.constant 0 : index
    %90 = vector.load %arg4[%c0_11, %c0_12] : memref<600x160xbf16, #tpu.memory_space<vmem>>, vector<600x160xbf16>
    %cst_13 = arith.constant dense<0.000000e+00> : vector<16x160xf32>
    %91 = tpu.matmul %89, %90, %cst_13 {dimension_numbers = #tpu.dot_dimension_numbers<[1], [0], [0], [1], [0, 0, 1, 1], [], []>} : vector<16x600xbf16>, vector<600x160xbf16>, vector<16x160xf32> -> vector<16x160xf32>
    %92 = vector.shape_cast %91 : vector<16x160xf32> to vector<2x8x160xf32>
    %93 = vector.extract_strided_slice %92 {offsets = [0, 0, 0], sizes = [2, 4, 160], strides = [1, 1, 1]} : vector<2x8x160xf32> to vector<2x4x160xf32>
    %94 = vector.extract_strided_slice %92 {offsets = [0, 4, 0], sizes = [2, 4, 160], strides = [1, 1, 1]} : vector<2x8x160xf32> to vector<2x4x160xf32>
    %95 = arith.maximumf %93, %94 : vector<2x4x160xf32>
    %96 = vector.extract_strided_slice %95 {offsets = [0, 0, 0], sizes = [2, 4, 80], strides = [1, 1, 1]} : vector<2x4x160xf32> to vector<2x4x80xf32>
    %97 = vector.extract_strided_slice %95 {offsets = [0, 0, 80], sizes = [2, 4, 80], strides = [1, 1, 1]} : vector<2x4x160xf32> to vector<2x4x80xf32>
    %98 = arith.maximumf %96, %97 : vector<2x4x80xf32>
    %c0_14 = arith.constant 0 : index
    %c0_15 = arith.constant 0 : index
    %99 = vector.load %arg5[%c0_14, %c0_15] : memref<1x80xf32, #tpu.memory_space<vmem>>, vector<1x80xf32>
    %100 = vector.shape_cast %99 : vector<1x80xf32> to vector<1x1x80xf32>
    %101 = vector.broadcast %100 : vector<1x1x80xf32> to vector<2x4x80xf32>
    %102 = arith.addf %98, %101 : vector<2x4x80xf32>
    %cst_16 = arith.constant 0.000000e+00 : f32
    %103 = vector.broadcast %cst_16 : f32 to vector<2x4x80xf32>
    %104 = arith.maximumf %102, %103 : vector<2x4x80xf32>
    %105 = vector.extract_strided_slice %104 {offsets = [0, 0, 0], sizes = [2, 1, 80], strides = [1, 1, 1]} : vector<2x4x80xf32> to vector<2x1x80xf32>
    %106 = vector.shape_cast %105 : vector<2x1x80xf32> to vector<2x80xf32>
    %107 = vector.extract_strided_slice %104 {offsets = [0, 1, 0], sizes = [2, 1, 80], strides = [1, 1, 1]} : vector<2x4x80xf32> to vector<2x1x80xf32>
    %108 = vector.shape_cast %107 : vector<2x1x80xf32> to vector<2x80xf32>
    %109 = vector.extract_strided_slice %104 {offsets = [0, 2, 0], sizes = [2, 1, 80], strides = [1, 1, 1]} : vector<2x4x80xf32> to vector<2x1x80xf32>
    %110 = vector.shape_cast %109 : vector<2x1x80xf32> to vector<2x80xf32>
    %111 = vector.extract_strided_slice %104 {offsets = [0, 3, 0], sizes = [2, 1, 80], strides = [1, 1, 1]} : vector<2x4x80xf32> to vector<2x1x80xf32>
    %112 = vector.shape_cast %111 : vector<2x1x80xf32> to vector<2x80xf32>
    %113 = tpu.concatenate %106, %108, %110, %112 in 1 : vector<2x80xf32>, vector<2x80xf32>, vector<2x80xf32>, vector<2x80xf32> -> vector<2x320xf32>
    %114 = arith.truncf %113 : vector<2x320xf32> to vector<2x320xbf16>
    %c0_17 = arith.constant 0 : index
    %c0_18 = arith.constant 0 : index
    %115 = vector.load %arg6[%c0_17, %c0_18] : memref<320x50xbf16, #tpu.memory_space<vmem>>, vector<320x50xbf16>
    %cst_19 = arith.constant dense<0.000000e+00> : vector<2x50xf32>
    %116 = tpu.matmul %114, %115, %cst_19 {dimension_numbers = #tpu.dot_dimension_numbers<[1], [0], [0], [1], [0, 0, 1, 1], [], []>} : vector<2x320xbf16>, vector<320x50xbf16>, vector<2x50xf32> -> vector<2x50xf32>
    %c0_20 = arith.constant 0 : index
    %c0_21 = arith.constant 0 : index
    %117 = vector.load %arg7[%c0_20, %c0_21] : memref<1x50xf32, #tpu.memory_space<vmem>>, vector<1x50xf32>
    %118 = vector.broadcast %117 : vector<1x50xf32> to vector<2x50xf32>
    %119 = arith.addf %116, %118 : vector<2x50xf32>
    %cst_22 = arith.constant 0.000000e+00 : f32
    %120 = vector.broadcast %cst_22 : f32 to vector<2x50xf32>
    %121 = arith.maximumf %119, %120 : vector<2x50xf32>
    %122 = arith.truncf %121 : vector<2x50xf32> to vector<2x50xbf16>
    %c0_23 = arith.constant 0 : index
    %c0_24 = arith.constant 0 : index
    %123 = vector.load %arg8[%c0_23, %c0_24] : memref<50x10xbf16, #tpu.memory_space<vmem>>, vector<50x10xbf16>
    %cst_25 = arith.constant dense<0.000000e+00> : vector<2x10xf32>
    %124 = tpu.matmul %122, %123, %cst_25 {dimension_numbers = #tpu.dot_dimension_numbers<[1], [0], [0], [1], [0, 0, 1, 1], [], []>} : vector<2x50xbf16>, vector<50x10xbf16>, vector<2x10xf32> -> vector<2x10xf32>
    %c0_26 = arith.constant 0 : index
    %c0_27 = arith.constant 0 : index
    %125 = vector.load %arg9[%c0_26, %c0_27] : memref<1x10xf32, #tpu.memory_space<vmem>>, vector<1x10xf32>
    %126 = vector.broadcast %125 : vector<1x10xf32> to vector<2x10xf32>
    %127 = arith.addf %124, %126 : vector<2x10xf32>
    %cst_28 = arith.constant dense<0xFF800000> : vector<2xf32>
    %128 = vector.multi_reduction <maximumf>, %127, %cst_28 [1] : vector<2x10xf32> to vector<2xf32>
    %129 = vector.shape_cast %128 : vector<2xf32> to vector<2x1xf32>
    %130 = vector.broadcast %129 : vector<2x1xf32> to vector<2x10xf32>
    %131 = arith.subf %127, %130 : vector<2x10xf32>
    %132 = math.exp %131 : vector<2x10xf32>
    %cst_29 = arith.constant dense<0.000000e+00> : vector<2xf32>
    %133 = vector.multi_reduction <add>, %132, %cst_29 [1] : vector<2x10xf32> to vector<2xf32>
    %134 = vector.shape_cast %133 : vector<2xf32> to vector<2x1xf32>
    %135 = math.log %134 : vector<2x1xf32>
    %136 = arith.addf %135, %129 : vector<2x1xf32>
    %137 = vector.broadcast %136 : vector<2x1xf32> to vector<2x10xf32>
    %138 = arith.subf %127, %137 : vector<2x10xf32>
    %c0_30 = arith.constant 0 : index
    %c0_31 = arith.constant 0 : index
    %139 = vector.load %arg10[%c0_30, %c0_31] : memref<2x10xf32, #tpu.memory_space<vmem>>, vector<2x10xf32>
    tpu.vector_store %arg10[%c0_30, %c0_31], %138 {strides = array<i32>} : memref<2x10xf32, #tpu.memory_space<vmem>>, vector<2x10xf32>,
    return
  }
  func.func @transform_0(%arg0: i32) -> (i32, i32, i32, i32) {
    %c0_i32 = arith.constant 0 : i32
    %c0_i32_0 = arith.constant 0 : i32
    %c0_i32_1 = arith.constant 0 : i32
    %c0_i32_2 = arith.constant 0 : i32
    return %arg0, %c0_i32, %c0_i32_0, %c0_i32_1 : i32, i32, i32, i32
  }
  func.func @transform_1(%arg0: i32) -> (i32, i32) {
    %c0_i32 = arith.constant 0 : i32
    %c0_i32_0 = arith.constant 0 : i32
    %c0_i32_1 = arith.constant 0 : i32
    return %c0_i32, %c0_i32_0 : i32, i32
  }
  func.func @transform_2(%arg0: i32) -> (i32, i32) {
    %c0_i32 = arith.constant 0 : i32
    %c0_i32_0 = arith.constant 0 : i32
    %c0_i32_1 = arith.constant 0 : i32
    return %c0_i32, %c0_i32_0 : i32, i32
  }
  func.func @transform_3(%arg0: i32) -> (i32, i32) {
    %c0_i32 = arith.constant 0 : i32
    %c0_i32_0 = arith.constant 0 : i32
    %c0_i32_1 = arith.constant 0 : i32
    return %c0_i32, %c0_i32_0 : i32, i32
  }
  func.func @transform_4(%arg0: i32) -> (i32, i32) {
    %c0_i32 = arith.constant 0 : i32
    %c0_i32_0 = arith.constant 0 : i32
    %c0_i32_1 = arith.constant 0 : i32
    return %c0_i32, %c0_i32_0 : i32, i32
  }
  func.func @transform_5(%arg0: i32) -> (i32, i32) {
    %c0_i32 = arith.constant 0 : i32
    %c0_i32_0 = arith.constant 0 : i32
    %c0_i32_1 = arith.constant 0 : i32
    return %c0_i32, %c0_i32_0 : i32, i32
  }
  func.func @transform_6(%arg0: i32) -> (i32, i32) {
    %c0_i32 = arith.constant 0 : i32
    %c0_i32_0 = arith.constant 0 : i32
    %c0_i32_1 = arith.constant 0 : i32
    return %c0_i32, %c0_i32_0 : i32, i32
  }
  func.func @transform_7(%arg0: i32) -> (i32, i32) {
    %c0_i32 = arith.constant 0 : i32
    %c0_i32_0 = arith.constant 0 : i32
    %c0_i32_1 = arith.constant 0 : i32
    return %c0_i32, %c0_i32_0 : i32, i32
  }
  func.func @transform_8(%arg0: i32) -> (i32, i32) {
    %c0_i32 = arith.constant 0 : i32
    %c0_i32_0 = arith.constant 0 : i32
    %c0_i32_1 = arith.constant 0 : i32
    return %c0_i32, %c0_i32_0 : i32, i32
  }
  func.func @transform_9(%arg0: i32) -> (i32, i32) {
    %c0_i32 = arith.constant 0 : i32
    %c0_i32_0 = arith.constant 0 : i32
    return %arg0, %c0_i32 : i32, i32
  }
}

</mosaic_0001>

<llo_original>
// kernel: convnet_forward.1
$region0: #{convnet_forward.1}
  #allocation0 [shape = 'u32[]', space=smem, size = 0x4, offset = 0x4, fixed_abs, tag = 'smem constant byte address 0x4 - core index']
  #allocation1 [shape = 'u32[144,128]{1,0:T(1,128)}', space=vmem, size = 0x12000, scoped, tag = 'internal scratch']
  %s0 = inlined_call_operand.vmem [shape: f32[2,4,7,28], index: 0, kind: input, shape index: {}]
  %s1 = inlined_call_operand.vmem [shape: bf16[140,240], index: 1, kind: input, shape index: {}]
  %s2 = inlined_call_operand.vmem [shape: f32[1,120], index: 2, kind: input, shape index: {}]
  %s3 = inlined_call_operand.vmem [shape: bf16[600,160], index: 3, kind: input, shape index: {}]
  %s4 = inlined_call_operand.vmem [shape: f32[1,80], index: 4, kind: input, shape index: {}]
  %s5 = inlined_call_operand.vmem [shape: bf16[320,50], index: 5, kind: input, shape index: {}]
  %s6 = inlined_call_operand.vmem [shape: f32[1,50], index: 6, kind: input, shape index: {}]
  %s7 = inlined_call_operand.vmem [shape: bf16[50,10], index: 7, kind: input, shape index: {}]
  %s8 = inlined_call_operand.vmem [shape: f32[1,10], index: 8, kind: input, shape index: {}]
  %s9 = inlined_call_operand.hbm [shape: f32[2,10], index: 9, kind: output, shape index: {}]
  %s10 = sld [smem:[#allocation0]]
  $region46: #{convnet_forward.1} parent=0
    _
  %s12 = ssub.s32 1, %s10
  %s13 = scalar_select 0, %s12, %s10
  $region1: #{convnet_forward.1} parent=0
    #allocation2 [shape = 'u8[1024]{0}', space=vmem, size = 0x400, scoped, tag = 'output window, operand 0, single buffered']
    #allocation3 [shape = 's32[1]{0}', space=sflag, size = 0x4, scoped, tag = 'scoped memory for convnet_forward.1']
    %14 = vsyncpa [#allocation3], 0
    // Predicated region
    $region2: #{convnet_forward.1} parent=1 // pred_check
      _
    $region3: #{convnet_forward.1} parent=1 // pred_check_branch
      %16 = sbr.rel (0) target = $region5
    $region4: #{convnet_forward.1} parent=1 // pred_region
      _
    $region5: #{convnet_forward.1} parent=1 // pred_fallthru
      _
    // Predicated region
    $region6: #{convnet_forward.1} parent=1 // pred_check
      _
    $region7: #{convnet_forward.1} parent=1 // pred_check_branch
      %18 = sbr.rel (0) target = $region9
    $region8: #{convnet_forward.1} parent=1 // pred_region
      _
    $region9: #{convnet_forward.1} parent=1 // pred_fallthru
      _
    // Predicated region
    $region10: #{convnet_forward.1} parent=1 // pred_check
      _
    $region11: #{convnet_forward.1} parent=1 // pred_check_branch
      %20 = sbr.rel (0) target = $region13
    $region12: #{convnet_forward.1} parent=1 // pred_region
      _
    $region13: #{convnet_forward.1} parent=1 // pred_fallthru
      _
    // Predicated region
    $region14: #{convnet_forward.1} parent=1 // pred_check
      _
    $region15: #{convnet_forward.1} parent=1 // pred_check_branch
      %22 = sbr.rel (0) target = $region17
    $region16: #{convnet_forward.1} parent=1 // pred_region
      _
    $region17: #{convnet_forward.1} parent=1 // pred_fallthru
      _
    // Predicated region
    $region18: #{convnet_forward.1} parent=1 // pred_check
      _
    $region19: #{convnet_forward.1} parent=1 // pred_check_branch
      %24 = sbr.rel (0) target = $region21
    $region20: #{convnet_forward.1} parent=1 // pred_region
      _
    $region21: #{convnet_forward.1} parent=1 // pred_fallthru
      _
    // Predicated region
    $region22: #{convnet_forward.1} parent=1 // pred_check
      _
    $region23: #{convnet_forward.1} parent=1 // pred_check_branch
      %26 = sbr.rel (0) target = $region25
    $region24: #{convnet_forward.1} parent=1 // pred_region
      _
    $region25: #{convnet_forward.1} parent=1 // pred_fallthru
      _
    // Predicated region
    $region26: #{convnet_forward.1} parent=1 // pred_check
      _
    $region27: #{convnet_forward.1} parent=1 // pred_check_branch
      %28 = sbr.rel (0) target = $region29
    $region28: #{convnet_forward.1} parent=1 // pred_region
      _
    $region29: #{convnet_forward.1} parent=1 // pred_fallthru
      _
    // Predicated region
    $region30: #{convnet_forward.1} parent=1 // pred_check
      _
    $region31: #{convnet_forward.1} parent=1 // pred_check_branch
      %30 = sbr.rel (0) target = $region33
    $region32: #{convnet_forward.1} parent=1 // pred_region
      _
    $region33: #{convnet_forward.1} parent=1 // pred_fallthru
      _
    // Predicated region
    $region34: #{convnet_forward.1} parent=1 // pred_check
      _
    $region35: #{convnet_forward.1} parent=1 // pred_check_branch
      %32 = sbr.rel (0) target = $region37
    $region36: #{convnet_forward.1} parent=1 // pred_region
      _
    $region37: #{convnet_forward.1} parent=1 // pred_fallthru
      _
    %v34 = vld [vmem:[%s0] sm:$0x7f]
    %v35 = vld [vmem:[%s0 + $0x8] sm:$0x7f]
    %v36 = vld [vmem:[%s0 + $0x10] sm:$0x7f]
    %v37 = vld [vmem:[%s0 + $0x18] sm:$0x7f]
    %v38 = vld [vmem:[%s0 + $0x20] sm:$0x7f]
    %v39 = vld [vmem:[%s0 + $0x28] sm:$0x7f]
    %v40 = vld [vmem:[%s0 + $0x30] sm:$0x7f]
    %v41 = vld [vmem:[%s0 + $0x38] sm:$0x7f]
    %44 = vrot.lane.b32.xlu0 %v35, 28
    %v45 = vpop.permute.xlu0 %44
    %46 = vrot.lane.b32.xlu0 %v39, 28
    %v47 = vpop.permute.xlu0 %46
    %52 = vrot.lane.b32.xlu0 %v36, 56
    %v53 = vpop.permute.xlu0 %52
    %54 = vrot.lane.b32.xlu0 %v40, 56
    %v55 = vpop.permute.xlu0 %54
    %60 = vrot.lane.b32.xlu0 %v37, 84
    %v61 = vpop.permute.xlu0 %60
    %62 = vrot.lane.b32.xlu0 %v41, 84
    %v63 = vpop.permute.xlu0 %62
    %v68 = vrot.slane %v34, 1
    %v69 = vrot.slane %v38, 1
    %70 = vrot.lane.b32.xlu0 %v68, 112
    %v71 = vpop.permute.xlu0 %70
    %72 = vrot.lane.b32.xlu0 %v69, 112
    %v73 = vpop.permute.xlu0 %72
    %vm76 = vcmask 228352
    %v77 = vsel %vm76, %v34, %v45
    %v78 = vsel %vm76, %v38, %v47
    %vm79 = vcmask 457728
    %v80 = vsel %vm79, %v77, %v53
    %v81 = vsel %vm79, %v78, %v55
    %vm82 = vcmask 687104
    %v83 = vsel %vm82, %v80, %v61
    %v84 = vsel %vm82, %v81, %v63
    %vm85 = vcmask 916480
    %v86 = vsel %vm85, %v83, %v71
    %v87 = vsel %vm85, %v84, %v73
    %88 = vrot.lane.b32.xlu0 %v36, 28
    %v89 = vpop.permute.xlu0 %88
    %90 = vrot.lane.b32.xlu0 %v40, 28
    %v91 = vpop.permute.xlu0 %90
    %94 = vrot.lane.b32.xlu0 %v37, 56
    %v95 = vpop.permute.xlu0 %94
    %96 = vrot.lane.b32.xlu0 %v41, 56
    %v97 = vpop.permute.xlu0 %96
    %100 = vrot.lane.b32.xlu0 %v68, 84
    %v101 = vpop.permute.xlu0 %100
    %102 = vrot.lane.b32.xlu0 %v69, 84
    %v103 = vpop.permute.xlu0 %102
    %v106 = vrot.slane %v35, 1
    %v107 = vrot.slane %v39, 1
    %108 = vrot.lane.b32.xlu0 %v106, 112
    %v109 = vpop.permute.xlu0 %108
    %110 = vrot.lane.b32.xlu0 %v107, 112
    %v111 = vpop.permute.xlu0 %110
    %v114 = vsel %vm76, %v35, %v89
    %v115 = vsel %vm76, %v39, %v91
    %v116 = vsel %vm79, %v114, %v95
    %v117 = vsel %vm79, %v115, %v97
    %v118 = vsel %vm82, %v116, %v101
    %v119 = vsel %vm82, %v117, %v103
    %v120 = vsel %vm85, %v118, %v109
    %v121 = vsel %vm85, %v119, %v111
    %122 = vrot.lane.b32.xlu0 %v37, 28
    %v123 = vpop.permute.xlu0 %122
    %124 = vrot.lane.b32.xlu0 %v41, 28
    %v125 = vpop.permute.xlu0 %124
    %128 = vrot.lane.b32.xlu0 %v68, 56
    %v129 = vpop.permute.xlu0 %128
    %130 = vrot.lane.b32.xlu0 %v69, 56
    %v131 = vpop.permute.xlu0 %130
    %134 = vrot.lane.b32.xlu0 %v106, 84
    %v135 = vpop.permute.xlu0 %134
    %136 = vrot.lane.b32.xlu0 %v107, 84
    %v137 = vpop.permute.xlu0 %136
    %v140 = vrot.slane %v36, 1
    %v141 = vrot.slane %v40, 1
    %142 = vrot.lane.b32.xlu0 %v140, 112
    %v143 = vpop.permute.xlu0 %142
    %144 = vrot.lane.b32.xlu0 %v141, 112
    %v145 = vpop.permute.xlu0 %144
    %v148 = vsel %vm76, %v36, %v123
    %v149 = vsel %vm76, %v40, %v125
    %v150 = vsel %vm79, %v148, %v129
    %v151 = vsel %vm79, %v149, %v131
    %v152 = vsel %vm82, %v150, %v135
    %v153 = vsel %vm82, %v151, %v137
    %v154 = vsel %vm85, %v152, %v143
    %v155 = vsel %vm85, %v153, %v145
    %156 = vrot.lane.b32.xlu0 %v68, 28
    %v157 = vpop.permute.xlu0 %156
    %158 = vrot.lane.b32.xlu0 %v69, 28
    %v159 = vpop.permute.xlu0 %158
    %162 = vrot.lane.b32.xlu0 %v106, 56
    %v163 = vpop.permute.xlu0 %162
    %164 = vrot.lane.b32.xlu0 %v107, 56
    %v165 = vpop.permute.xlu0 %164
    %168 = vrot.lane.b32.xlu0 %v140, 84
    %v169 = vpop.permute.xlu0 %168
    %170 = vrot.lane.b32.xlu0 %v141, 84
    %v171 = vpop.permute.xlu0 %170
    %v174 = vrot.slane %v37, 1
    %v175 = vrot.slane %v41, 1
    %176 = vrot.lane.b32.xlu0 %v174, 112
    %v177 = vpop.permute.xlu0 %176
    %178 = vrot.lane.b32.xlu0 %v175, 112
    %v179 = vpop.permute.xlu0 %178
    %v182 = vsel %vm76, %v37, %v157
    %v183 = vsel %vm76, %v41, %v159
    %v184 = vsel %vm79, %v182, %v163
    %v185 = vsel %vm79, %v183, %v165
    %v186 = vsel %vm82, %v184, %v169
    %v187 = vsel %vm82, %v185, %v171
    %v188 = vsel %vm85, %v186, %v177
    %v189 = vsel %vm85, %v187, %v179
    %v192 = vrot.slane %v120, 2
    %v193 = vrot.slane %v109, 2
    %v194 = vrot.slane %v121, 2
    %v195 = vrot.slane %v111, 2
    %v202 = vrot.slane %v154, 4
    %v203 = vrot.slane %v143, 4
    %v204 = vrot.slane %v155, 4
    %v205 = vrot.slane %v145, 4
    %v212 = vrot.slane %v188, 6
    %v213 = vrot.slane %v177, 6
    %v214 = vrot.slane %v189, 6
    %v215 = vrot.slane %v179, 6
    %vm220 = vcmask 1045504
    %v221 = vsel %vm220, %v86, %v192
    %v222 = vsel %vm220, %v71, %v193
    %v223 = vsel %vm220, %v87, %v194
    %v224 = vsel %vm220, %v73, %v195
    %vm225 = vcmask 1043456
    %v226 = vsel %vm225, %v192, %v202
    %v227 = vsel %vm225, %v193, %v203
    %v228 = vsel %vm225, %v194, %v204
    %v229 = vsel %vm225, %v195, %v205
    %vm230 = vcmask 1041408
    %v231 = vsel %vm230, %v202, %v212
    %v232 = vsel %vm230, %v203, %v213
    %v233 = vsel %vm230, %v204, %v214
    %v234 = vsel %vm230, %v205, %v215
    %v235 = vpack.c.bf16 %v226, %v221
    %v236 = vpack.c.bf16 %v227, %v222
    %v237 = vpack.c.bf16 %v223, %v231
    %v238 = vpack.c.bf16 %v224, %v232
    %v239 = vpack.c.bf16 %v233, %v228
    %v240 = vpack.c.bf16 %v234, %v229
    %v241 = vld [vmem:[%s1] sm:$0xff]
    %v242 = vld [vmem:[%s1 + $0x8] sm:$0xff]
    %v243 = vld [vmem:[%s1 + $0x10] sm:$0xff]
    %v244 = vld [vmem:[%s1 + $0x18] sm:$0xff]
    %v245 = vld [vmem:[%s1 + $0x20] sm:$0xff]
    %v246 = vld [vmem:[%s1 + $0x28] sm:$0xff]
    %v247 = vld [vmem:[%s1 + $0x30] sm:$0xff]
    %v248 = vld [vmem:[%s1 + $0x38] sm:$0xff]
    %v249 = vld [vmem:[%s1 + $0x40] sm:$0xff]
    %v250 = vld [vmem:[%s1 + $0x48] sm:$0xff]
    %v251 = vld [vmem:[%s1 + $0x50] sm:$0xff]
    %v252 = vld [vmem:[%s1 + $0x58] sm:$0xff]
    %v253 = vld [vmem:[%s1 + $0x60] sm:$0xff]
    %v254 = vld [vmem:[%s1 + $0x68] sm:$0xff]
    %v255 = vld [vmem:[%s1 + $0x70] sm:$0xff]
    %v256 = vld [vmem:[%s1 + $0x78] sm:$0xff]
    %v257 = vld [vmem:[%s1 + $0x80] sm:$0xff]
    %v258 = vld [vmem:[%s1 + $0x88] sm:$0x33]
    %v277 = vunpack.c.l.b16 %v241
    %v278 = vunpack.c.h.b16 %v241
    %v279 = vunpack.c.l.b16 %v242
    %v280 = vunpack.c.h.b16 %v242
    %v281 = vunpack.c.l.b16 %v243
    %v282 = vunpack.c.h.b16 %v243
    %v283 = vunpack.c.l.b16 %v244
    %v284 = vunpack.c.h.b16 %v244
    %v285 = vunpack.c.l.b16 %v245
    %v286 = vunpack.c.h.b16 %v245
    %v287 = vunpack.c.l.b16 %v246
    %v288 = vunpack.c.h.b16 %v246
    %v289 = vunpack.c.l.b16 %v247
    %v290 = vunpack.c.h.b16 %v247
    %v291 = vunpack.c.l.b16 %v248
    %v292 = vunpack.c.h.b16 %v248
    %v293 = vunpack.c.l.b16 %v249
    %v294 = vunpack.c.h.b16 %v249
    %v295 = vunpack.c.l.b16 %v250
    %v296 = vunpack.c.h.b16 %v250
    %v297 = vunpack.c.l.b16 %v251
    %v298 = vunpack.c.h.b16 %v251
    %v299 = vunpack.c.l.b16 %v252
    %v300 = vunpack.c.h.b16 %v252
    %v301 = vunpack.c.l.b16 %v253
    %v302 = vunpack.c.h.b16 %v253
    %v303 = vunpack.c.l.b16 %v254
    %v304 = vunpack.c.h.b16 %v254
    %v305 = vunpack.c.l.b16 %v255
    %v306 = vunpack.c.h.b16 %v255
    %v307 = vunpack.c.l.b16 %v256
    %v308 = vunpack.c.h.b16 %v256
    %v309 = vunpack.c.l.b16 %v257
    %v310 = vunpack.c.h.b16 %v257
    %v311 = vunpack.c.l.b16 %v258
    %v312 = vunpack.c.h.b16 %v258
    %v313 = vpack.c.b16 %v279, %v277
    %v314 = vpack.c.b16 %v280, %v278
    %v315 = vpack.c.b16 %v283, %v281
    %v316 = vpack.c.b16 %v284, %v282
    %v317 = vpack.c.b16 %v287, %v285
    %v318 = vpack.c.b16 %v288, %v286
    %v319 = vpack.c.b16 %v291, %v289
    %v320 = vpack.c.b16 %v292, %v290
    %v321 = vpack.c.b16 %v295, %v293
    %v322 = vpack.c.b16 %v296, %v294
    %v323 = vpack.c.b16 %v299, %v297
    %v324 = vpack.c.b16 %v300, %v298
    %v325 = vpack.c.b16 %v303, %v301
    %v326 = vpack.c.b16 %v304, %v302
    %v327 = vpack.c.b16 %v307, %v305
    %v328 = vpack.c.b16 %v308, %v306
    %v329 = vpack.c.b16 %v311, %v309
    %v330 = vpack.c.b16 %v312, %v310
    %vm347 = vcmask 97280
    %v349 = vsel %vm347, %v236, 0
    %v352 = vsel %vm347, %v238, 0
    %v355 = vsel %vm347, %v240, 0
    %v358 = vsel %vm220, %v329, 0
    %v361 = vsel %vm220, %v330, 0
    %363 = vmatprep.subr.bf16.mxu0 %v314
    %364 = vmatpush1.bf16.msra.mxu0 %v313
    %365 = vmatprep.subr.bf16.mxu0 %v316
    %366 = vmatpush1.bf16.msra.mxu0 %v315
    %367 = vmatprep.subr.bf16.mxu0 %v318
    %368 = vmatpush1.bf16.msra.mxu0 %v317
    %369 = vmatprep.subr.bf16.mxu0 %v320
    %370 = vmatpush1.bf16.msra.mxu0 %v319
    %371 = vmatprep.subr.bf16.mxu0 %v322
    %372 = vmatpush1.bf16.msra.mxu0 %v321
    %373 = vmatprep.subr.bf16.mxu0 %v324
    %374 = vmatpush1.bf16.msra.mxu0 %v323
    %375 = vmatprep.subr.bf16.mxu0 %v326
    %376 = vmatpush1.bf16.msra.mxu0 %v325
    %377 = vmatprep.subr.bf16.mxu0 %v328
    %378 = vmatpush1.bf16.msra.mxu0 %v327
    %379 = vmatprep.subr.bf16.mxu0 %v361
    %380 = vmatpush1.bf16.msra.mxu0 %v358
    %381 = vmatprep.subr.bf16.mxu0 0
    %382 = vmatpush1.bf16.msra.mxu0 0
    %383 = vmatprep.subr.bf16.mxu0 0
    %384 = vmatpush1.bf16.msra.mxu0 0
    %385 = vmatprep.subr.bf16.mxu0 0
    %386 = vmatpush1.bf16.msra.mxu0 0
    %387 = vmatprep.subr.bf16.mxu0 0
    %388 = vmatpush1.bf16.msra.mxu0 0
    %389 = vmatprep.subr.bf16.mxu0 0
    %390 = vmatpush1.bf16.msra.mxu0 0
    %391 = vmatprep.subr.bf16.mxu0 0
    %392 = vmatpush1.bf16.msra.mxu0 0
    %393 = vmatprep.subr.bf16.mxu0 0
    %394 = vmatpush1.bf16.msra.mxu0 0
    %395 = vmatprep.mubr.bf16.mxu0 %v349
    %396 = vmatmul.mubr.bf16.gmra.mrb[0].mxu0 %v235
    %v397 = vpop.f32.mrb[0].mxu0
    %v398 = vadd.f32 0.0, %v397
    %v399 = vpop.f32.mrb[0].mxu0
    %v400 = vadd.f32 0.0, %v399
    %v401 = vpop.f32.mrb[0].mxu0
    %v402 = vadd.f32 0.0, %v401
    %v403 = vpop.f32.mrb[0].mxu0
    %v404 = vadd.f32 0.0, %v403
    %405 = vmatprep.mubr.bf16.mxu0 %v352
    %406 = vmatmul.mubr.bf16.gmra.mrb[0].mxu0 %v237
    %v407 = vpop.f32.mrb[0].mxu0
    %v408 = vadd.f32 0.0, %v407
    %v409 = vpop.f32.mrb[0].mxu0
    %v410 = vadd.f32 0.0, %v409
    %v411 = vpop.f32.mrb[0].mxu0
    %v412 = vadd.f32 0.0, %v411
    %v413 = vpop.f32.mrb[0].mxu0
    %v414 = vadd.f32 0.0, %v413
    %415 = vmatprep.mubr.bf16.mxu0 %v355
    %416 = vmatmul.mubr.bf16.gmra.mrb[0].mxu0 %v239
    %v417 = vpop.f32.mrb[0].mxu0
    %v418 = vadd.f32 0.0, %v417
    %v419 = vpop.f32.mrb[0].mxu0
    %v420 = vadd.f32 0.0, %v419
    %v421 = vpop.f32.mrb[0].mxu0
    %v422 = vadd.f32 0.0, %v421
    %v423 = vpop.f32.mrb[0].mxu0
    %v424 = vadd.f32 0.0, %v423
    %425 = vdwg.mxu0
    %v434 = vrot.slane %v398, 6
    %v435 = vrot.slane %v402, 6
    %v436 = vsel %vm230, %v434, %v435
    %v437 = vrot.slane %v400, 6
    %v438 = vrot.slane %v404, 6
    %v439 = vsel %vm230, %v437, %v438
    %v440 = vrot.slane %v412, 6
    %v441 = vrot.slane %v418, 6
    %v442 = vsel %vm230, %v440, %v441
    %v443 = vrot.slane %v414, 6
    %v444 = vrot.slane %v420, 6
    %v445 = vsel %vm230, %v443, %v444
    %v450 = vmax.f32 %v398, %v436
    %v451 = vmax.f32 %v400, %v439
    %v452 = vmax.f32 %v412, %v442
    %v453 = vmax.f32 %v414, %v445
    %458 = vrot.lane.b32.xlu0 %v450, 8
    %v459 = vpop.permute.xlu0 %458
    %460 = vrot.lane.b32.xlu0 %v451, 8
    %v461 = vpop.permute.xlu0 %460
    %462 = vrot.lane.b32.xlu0 %v452, 8
    %v463 = vpop.permute.xlu0 %462
    %464 = vrot.lane.b32.xlu0 %v453, 8
    %v465 = vpop.permute.xlu0 %464
    %vm466 = vcmask 64512
    %v467 = vsel %vm466, %v459, %v461
    %v468 = vsel %vm466, %v463, %v465
    %v471 = vmax.f32 %v450, %v467
    %v472 = vmax.f32 %v452, %v468
    %v473 = vld [vmem:[%s2] sm:$0x1]
    %v475 = vlaneseq
    %v476 = vshrl.u32 %v475, 7
    %v477 = vsub.s32 0, %v476
    %v478 = vrot.slane %v473, %v477
    %v480 = vadd.f32 %v471, %v478
    %v481 = vadd.f32 %v472, %v478
    %v482 = vmax.f32 %v480, 0.0
    %v483 = vmax.f32 %v481, 0.0
    %v488 = vrot.slane %v408, 6
    %v489 = vrot.slane %v410, 6
    %v490 = vrot.slane %v422, 6
    %v491 = vrot.slane %v424, 6
    %v496 = vmax.f32 %v402, %v488
    %v497 = vmax.f32 %v404, %v489
    %v498 = vmax.f32 %v408, %v488
    %v499 = vmax.f32 %v410, %v489
    %v500 = vmax.f32 %v418, %v490
    %v501 = vmax.f32 %v420, %v491
    %v502 = vmax.f32 %v422, %v490
    %v503 = vmax.f32 %v424, %v491
    %512 = vrot.lane.b32.xlu0 %v496, 8
    %v513 = vpop.permute.xlu0 %512
    %514 = vrot.lane.b32.xlu0 %v497, 8
    %v515 = vpop.permute.xlu0 %514
    %516 = vrot.lane.b32.xlu0 %v498, 8
    %v517 = vpop.permute.xlu0 %516
    %518 = vrot.lane.b32.xlu0 %v499, 8
    %v519 = vpop.permute.xlu0 %518
    %520 = vrot.lane.b32.xlu0 %v500, 8
    %v521 = vpop.permute.xlu0 %520
    %522 = vrot.lane.b32.xlu0 %v501, 8
    %v523 = vpop.permute.xlu0 %522
    %524 = vrot.lane.b32.xlu0 %v502, 8
    %v525 = vpop.permute.xlu0 %524
    %526 = vrot.lane.b32.xlu0 %v503, 8
    %v527 = vpop.permute.xlu0 %526
    %v528 = vsel %vm466, %v513, %v515
    %v529 = vsel %vm466, %v517, %v519
    %v530 = vsel %vm466, %v521, %v523
    %v531 = vsel %vm466, %v525, %v527
    %v536 = vmax.f32 %v496, %v528
    %v537 = vmax.f32 %v498, %v529
    %v538 = vmax.f32 %v500, %v530
    %v539 = vmax.f32 %v502, %v531
    %v540 = vadd.f32 %v536, %v478
    %v541 = vadd.f32 %v537, %v478
    %v542 = vadd.f32 %v538, %v478
    %v543 = vadd.f32 %v539, %v478
    %v544 = vmax.f32 %v540, 0.0
    %v545 = vmax.f32 %v541, 0.0
    %v546 = vmax.f32 %v542, 0.0
    %v547 = vmax.f32 %v543, 0.0
    %v550 = vrot.slane %v544, 4
    %v551 = vrot.slane %v546, 4
    %552 = vrot.lane.b32.xlu0 %v550, 120
    %v553 = vpop.permute.xlu0 %552
    %554 = vrot.lane.b32.xlu0 %v551, 120
    %v555 = vpop.permute.xlu0 %554
    %v560 = vrot.slane %v482, 1
    %v561 = vrot.slane %v483, 1
    %562 = vrot.lane.b32.xlu0 %v560, 112
    %v563 = vpop.permute.xlu0 %562
    %564 = vrot.lane.b32.xlu0 %v561, 112
    %v565 = vpop.permute.xlu0 %564
    %vm570 = vcmask 1042432
    %v571 = vrot.slane %v544, 5
    %v572 = vrot.slane %v545, 5
    %v573 = vsel %vm570, %v571, %v572
    %v574 = vrot.slane %v546, 5
    %v575 = vrot.slane %v547, 5
    %v576 = vsel %vm570, %v574, %v575
    %577 = vrot.lane.b32.xlu0 %v573, 104
    %v578 = vpop.permute.xlu0 %577
    %579 = vrot.lane.b32.xlu0 %v576, 104
    %v580 = vpop.permute.xlu0 %579
    %v583 = vrot.slane %v482, 2
    %v584 = vrot.slane %v483, 2
    %585 = vrot.lane.b32.xlu0 %v583, 96
    %v586 = vpop.permute.xlu0 %585
    %587 = vrot.lane.b32.xlu0 %v584, 96
    %v588 = vpop.permute.xlu0 %587
    %vm591 = vcmask 982016
    %v592 = vsel %vm591, %v482, %v553
    %v593 = vsel %vm591, %v483, %v555
    %v594 = vsel %vm85, %v553, %v563
    %v595 = vsel %vm85, %v555, %v565
    %vm596 = vcmask 850944
    %v597 = vsel %vm596, %v563, %v578
    %v598 = vsel %vm596, %v565, %v580
    %vm599 = vcmask 785408
    %v600 = vsel %vm599, %v578, %v586
    %v601 = vsel %vm599, %v580, %v588
    %v602 = vrot.slane %v482, 5
    %v603 = vrot.slane %v483, 5
    %604 = vrot.lane.b32.xlu0 %v602, 120
    %v605 = vpop.permute.xlu0 %604
    %606 = vrot.lane.b32.xlu0 %v603, 120
    %v607 = vpop.permute.xlu0 %606
    %vm610 = vcmask 1046528
    %v611 = vrot.slane %v544, 1
    %v612 = vrot.slane %v545, 1
    %v613 = vsel %vm610, %v611, %v612
    %v614 = vrot.slane %v546, 1
    %v615 = vrot.slane %v547, 1
    %v616 = vsel %vm610, %v614, %v615
    %617 = vrot.lane.b32.xlu0 %v613, 112
    %v618 = vpop.permute.xlu0 %617
    %619 = vrot.lane.b32.xlu0 %v616, 112
    %v620 = vpop.permute.xlu0 %619
    %v623 = vrot.slane %v482, 6
    %v624 = vrot.slane %v483, 6
    %625 = vrot.lane.b32.xlu0 %v623, 104
    %v626 = vpop.permute.xlu0 %625
    %627 = vrot.lane.b32.xlu0 %v624, 104
    %v628 = vpop.permute.xlu0 %627
    %v631 = vrot.slane %v544, 2
    %v632 = vrot.slane %v545, 2
    %v633 = vsel %vm220, %v631, %v632
    %v634 = vrot.slane %v546, 2
    %v635 = vrot.slane %v547, 2
    %v636 = vsel %vm220, %v634, %v635
    %637 = vrot.lane.b32.xlu0 %v633, 96
    %v638 = vpop.permute.xlu0 %637
    %639 = vrot.lane.b32.xlu0 %v636, 96
    %v640 = vpop.permute.xlu0 %639
    %v643 = vsel %vm591, %v544, %v605
    %v644 = vsel %vm591, %v546, %v607
    %v645 = vsel %vm85, %v605, %v618
    %v646 = vsel %vm85, %v607, %v620
    %v647 = vsel %vm596, %v618, %v626
    %v648 = vsel %vm596, %v620, %v628
    %v649 = vsel %vm599, %v626, %v638
    %v650 = vsel %vm599, %v628, %v640
    %v651 = vsel %vm225, %v592, %v643
    %v652 = vsel %vm225, %v594, %v645
    %v653 = vsel %vm225, %v597, %v647
    %v654 = vsel %vm225, %v600, %v649
    %v655 = vsel %vm225, %v586, %v638
    %v656 = vsel %vm225, %v593, %v644
    %v657 = vsel %vm225, %v595, %v646
    %v658 = vsel %vm225, %v598, %v648
    %v659 = vsel %vm225, %v601, %v650
    %v660 = vsel %vm225, %v588, %v640
    %v661 = vpack.c.bf16 %v656, %v651
    %v662 = vpack.c.bf16 %v657, %v652
    %v663 = vpack.c.bf16 %v658, %v653
    %v664 = vpack.c.bf16 %v659, %v654
    %v665 = vpack.c.bf16 %v660, %v655
    %v666 = vld [vmem:[%s3] sm:$0xff]
    %v667 = vld [vmem:[%s3 + $0x8] sm:$0xff]
    %v668 = vld [vmem:[%s3 + $0x10] sm:$0xff]
    %v669 = vld [vmem:[%s3 + $0x18] sm:$0xff]
    %v670 = vld [vmem:[%s3 + $0x20] sm:$0xff]
    %v671 = vld [vmem:[%s3 + $0x28] sm:$0xff]
    %v672 = vld [vmem:[%s3 + $0x30] sm:$0xff]
    %v673 = vld [vmem:[%s3 + $0x38] sm:$0xff]
    %v674 = vld [vmem:[%s3 + $0x40] sm:$0xff]
    %v675 = vld [vmem:[%s3 + $0x48] sm:$0xff]
    %v676 = vld [vmem:[%s3 + $0x50] sm:$0xff]
    %v677 = vld [vmem:[%s3 + $0x58] sm:$0xff]
    %v678 = vld [vmem:[%s3 + $0x60] sm:$0xff]
    %v679 = vld [vmem:[%s3 + $0x68] sm:$0xff]
    %v680 = vld [vmem:[%s3 + $0x70] sm:$0xff]
    %v681 = vld [vmem:[%s3 + $0x78] sm:$0xff]
    %v682 = vld [vmem:[%s3 + $0x80] sm:$0xff]
    %v683 = vld [vmem:[%s3 + $0x88] sm:$0xff]
    %v684 = vld [vmem:[%s3 + $0x90] sm:$0xff]
    %v685 = vld [vmem:[%s3 + $0x98] sm:$0xff]
    %v686 = vld [vmem:[%s3 + $0xa0] sm:$0xff]
    %v687 = vld [vmem:[%s3 + $0xa8] sm:$0xff]
    %v688 = vld [vmem:[%s3 + $0xb0] sm:$0xff]
    %v689 = vld [vmem:[%s3 + $0xb8] sm:$0xff]
    %v690 = vld [vmem:[%s3 + $0xc0] sm:$0xff]
    %v691 = vld [vmem:[%s3 + $0xc8] sm:$0xff]
    %v692 = vld [vmem:[%s3 + $0xd0] sm:$0xff]
    %v693 = vld [vmem:[%s3 + $0xd8] sm:$0xff]
    %v694 = vld [vmem:[%s3 + $0xe0] sm:$0xff]
    %v695 = vld [vmem:[%s3 + $0xe8] sm:$0xff]
    %v696 = vld [vmem:[%s3 + $0xf0] sm:$0xff]
    %v697 = vld [vmem:[%s3 + $0xf8] sm:$0xff]
    %v698 = vld [vmem:[%s3 + $0x100] sm:$0xff]
    %v699 = vld [vmem:[%s3 + $0x108] sm:$0xff]
    %v700 = vld [vmem:[%s3 + $0x110] sm:$0xff]
    %v701 = vld [vmem:[%s3 + $0x118] sm:$0xff]
    %v702 = vld [vmem:[%s3 + $0x120] sm:$0xff]
    %v703 = vld [vmem:[%s3 + $0x128] sm:$0xff]
    %v704 = vld [vmem:[%s3 + $0x130] sm:$0xff]
    %v705 = vld [vmem:[%s3 + $0x138] sm:$0xff]
    %v706 = vld [vmem:[%s3 + $0x140] sm:$0xff]
    %v707 = vld [vmem:[%s3 + $0x148] sm:$0xff]
    %v708 = vld [vmem:[%s3 + $0x150] sm:$0xff]
    %v709 = vld [vmem:[%s3 + $0x158] sm:$0xff]
    %v710 = vld [vmem:[%s3 + $0x160] sm:$0xff]
    %v711 = vld [vmem:[%s3 + $0x168] sm:$0xff]
    %v712 = vld [vmem:[%s3 + $0x170] sm:$0xff]
    %v713 = vld [vmem:[%s3 + $0x178] sm:$0xff]
    %v714 = vld [vmem:[%s3 + $0x180] sm:$0xff]
    %v715 = vld [vmem:[%s3 + $0x188] sm:$0xff]
    %v716 = vld [vmem:[%s3 + $0x190] sm:$0xff]
    %v717 = vld [vmem:[%s3 + $0x198] sm:$0xff]
    %v718 = vld [vmem:[%s3 + $0x1a0] sm:$0xff]
    %v719 = vld [vmem:[%s3 + $0x1a8] sm:$0xff]
    %v720 = vld [vmem:[%s3 + $0x1b0] sm:$0xff]
    %v721 = vld [vmem:[%s3 + $0x1b8] sm:$0xff]
    %v722 = vld [vmem:[%s3 + $0x1c0] sm:$0xff]
    %v723 = vld [vmem:[%s3 + $0x1c8] sm:$0xff]
    %v724 = vld [vmem:[%s3 + $0x1d0] sm:$0xff]
    %v725 = vld [vmem:[%s3 + $0x1d8] sm:$0xff]
    %v726 = vld [vmem:[%s3 + $0x1e0] sm:$0xff]
    %v727 = vld [vmem:[%s3 + $0x1e8] sm:$0xff]
    %v728 = vld [vmem:[%s3 + $0x1f0] sm:$0xff]
    %v729 = vld [vmem:[%s3 + $0x1f8] sm:$0xff]
    %v730 = vld [vmem:[%s3 + $0x200] sm:$0xff]
    %v731 = vld [vmem:[%s3 + $0x208] sm:$0xff]
    %v732 = vld [vmem:[%s3 + $0x210] sm:$0xff]
    %v733 = vld [vmem:[%s3 + $0x218] sm:$0xff]
    %v734 = vld [vmem:[%s3 + $0x220] sm:$0xff]
    %v735 = vld [vmem:[%s3 + $0x228] sm:$0xff]
    %v736 = vld [vmem:[%s3 + $0x230] sm:$0xff]
    %v737 = vld [vmem:[%s3 + $0x238] sm:$0xff]
    %v738 = vld [vmem:[%s3 + $0x240] sm:$0xff]
    %v739 = vld [vmem:[%s3 + $0x248] sm:$0xff]
    %v740 = vld [vmem:[%s3 + $0x250] sm:$0xff]
    %v816 = vunpack.c.l.b16 %v666
    %v817 = vunpack.c.h.b16 %v666
    %v818 = vunpack.c.l.b16 %v667
    %v819 = vunpack.c.h.b16 %v667
    %v820 = vunpack.c.l.b16 %v668
    %v821 = vunpack.c.h.b16 %v668
    %v822 = vunpack.c.l.b16 %v669
    %v823 = vunpack.c.h.b16 %v669
    %v824 = vunpack.c.l.b16 %v670
    %v825 = vunpack.c.h.b16 %v670
    %v826 = vunpack.c.l.b16 %v671
    %v827 = vunpack.c.h.b16 %v671
    %v828 = vunpack.c.l.b16 %v672
    %v829 = vunpack.c.h.b16 %v672
    %v830 = vunpack.c.l.b16 %v673
    %v831 = vunpack.c.h.b16 %v673
    %v832 = vunpack.c.l.b16 %v674
    %v833 = vunpack.c.h.b16 %v674
    %v834 = vunpack.c.l.b16 %v675
    %v835 = vunpack.c.h.b16 %v675
    %v836 = vunpack.c.l.b16 %v676
    %v837 = vunpack.c.h.b16 %v676
    %v838 = vunpack.c.l.b16 %v677
    %v839 = vunpack.c.h.b16 %v677
    %v840 = vunpack.c.l.b16 %v678
    %v841 = vunpack.c.h.b16 %v678
    %v842 = vunpack.c.l.b16 %v679
    %v843 = vunpack.c.h.b16 %v679
    %v844 = vunpack.c.l.b16 %v680
    %v845 = vunpack.c.h.b16 %v680
    %v846 = vunpack.c.l.b16 %v681
    %v847 = vunpack.c.h.b16 %v681
    %v848 = vunpack.c.l.b16 %v682
    %v849 = vunpack.c.h.b16 %v682
    %v850 = vunpack.c.l.b16 %v683
    %v851 = vunpack.c.h.b16 %v683
    %v852 = vunpack.c.l.b16 %v684
    %v853 = vunpack.c.h.b16 %v684
    %v854 = vunpack.c.l.b16 %v685
    %v855 = vunpack.c.h.b16 %v685
    %v856 = vunpack.c.l.b16 %v686
    %v857 = vunpack.c.h.b16 %v686
    %v858 = vunpack.c.l.b16 %v687
    %v859 = vunpack.c.h.b16 %v687
    %v860 = vunpack.c.l.b16 %v688
    %v861 = vunpack.c.h.b16 %v688
    %v862 = vunpack.c.l.b16 %v689
    %v863 = vunpack.c.h.b16 %v689
    %v864 = vunpack.c.l.b16 %v690
    %v865 = vunpack.c.h.b16 %v690
    %v866 = vunpack.c.l.b16 %v691
    %v867 = vunpack.c.h.b16 %v691
    %v868 = vunpack.c.l.b16 %v692
    %v869 = vunpack.c.h.b16 %v692
    %v870 = vunpack.c.l.b16 %v693
    %v871 = vunpack.c.h.b16 %v693
    %v872 = vunpack.c.l.b16 %v694
    %v873 = vunpack.c.h.b16 %v694
    %v874 = vunpack.c.l.b16 %v695
    %v875 = vunpack.c.h.b16 %v695
    %v876 = vunpack.c.l.b16 %v696
    %v877 = vunpack.c.h.b16 %v696
    %v878 = vunpack.c.l.b16 %v697
    %v879 = vunpack.c.h.b16 %v697
    %v880 = vunpack.c.l.b16 %v698
    %v881 = vunpack.c.h.b16 %v698
    %v882 = vunpack.c.l.b16 %v699
    %v883 = vunpack.c.h.b16 %v699
    %v884 = vunpack.c.l.b16 %v700
    %v885 = vunpack.c.h.b16 %v700
    %v886 = vunpack.c.l.b16 %v701
    %v887 = vunpack.c.h.b16 %v701
    %v888 = vunpack.c.l.b16 %v702
    %v889 = vunpack.c.h.b16 %v702
    %v890 = vunpack.c.l.b16 %v703
    %v891 = vunpack.c.h.b16 %v703
    %v892 = vunpack.c.l.b16 %v704
    %v893 = vunpack.c.h.b16 %v704
    %v894 = vunpack.c.l.b16 %v705
    %v895 = vunpack.c.h.b16 %v705
    %v896 = vunpack.c.l.b16 %v706
    %v897 = vunpack.c.h.b16 %v706
    %v898 = vunpack.c.l.b16 %v707
    %v899 = vunpack.c.h.b16 %v707
    %v900 = vunpack.c.l.b16 %v708
    %v901 = vunpack.c.h.b16 %v708
    %v902 = vunpack.c.l.b16 %v709
    %v903 = vunpack.c.h.b16 %v709
    %v904 = vunpack.c.l.b16 %v710
    %v905 = vunpack.c.h.b16 %v710
    %v906 = vunpack.c.l.b16 %v711
    %v907 = vunpack.c.h.b16 %v711
    %v908 = vunpack.c.l.b16 %v712
    %v909 = vunpack.c.h.b16 %v712
    %v910 = vunpack.c.l.b16 %v713
    %v911 = vunpack.c.h.b16 %v713
    %v912 = vunpack.c.l.b16 %v714
    %v913 = vunpack.c.h.b16 %v714
    %v914 = vunpack.c.l.b16 %v715
    %v915 = vunpack.c.h.b16 %v715
    %v916 = vunpack.c.l.b16 %v716
    %v917 = vunpack.c.h.b16 %v716
    %v918 = vunpack.c.l.b16 %v717
    %v919 = vunpack.c.h.b16 %v717
    %v920 = vunpack.c.l.b16 %v718
    %v921 = vunpack.c.h.b16 %v718
    %v922 = vunpack.c.l.b16 %v719
    %v923 = vunpack.c.h.b16 %v719
    %v924 = vunpack.c.l.b16 %v720
    %v925 = vunpack.c.h.b16 %v720
    %v926 = vunpack.c.l.b16 %v721
    %v927 = vunpack.c.h.b16 %v721
    %v928 = vunpack.c.l.b16 %v722
    %v929 = vunpack.c.h.b16 %v722
    %v930 = vunpack.c.l.b16 %v723
    %v931 = vunpack.c.h.b16 %v723
    %v932 = vunpack.c.l.b16 %v724
    %v933 = vunpack.c.h.b16 %v724
    %v934 = vunpack.c.l.b16 %v725
    %v935 = vunpack.c.h.b16 %v725
    %v936 = vunpack.c.l.b16 %v726
    %v937 = vunpack.c.h.b16 %v726
    %v938 = vunpack.c.l.b16 %v727
    %v939 = vunpack.c.h.b16 %v727
    %v940 = vunpack.c.l.b16 %v728
    %v941 = vunpack.c.h.b16 %v728
    %v942 = vunpack.c.l.b16 %v729
    %v943 = vunpack.c.h.b16 %v729
    %v944 = vunpack.c.l.b16 %v730
    %v945 = vunpack.c.h.b16 %v730
    %v946 = vunpack.c.l.b16 %v731
    %v947 = vunpack.c.h.b16 %v731
    %v948 = vunpack.c.l.b16 %v732
    %v949 = vunpack.c.h.b16 %v732
    %v950 = vunpack.c.l.b16 %v733
    %v951 = vunpack.c.h.b16 %v733
    %v952 = vunpack.c.l.b16 %v734
    %v953 = vunpack.c.h.b16 %v734
    %v954 = vunpack.c.l.b16 %v735
    %v955 = vunpack.c.h.b16 %v735
    %v956 = vunpack.c.l.b16 %v736
    %v957 = vunpack.c.h.b16 %v736
    %v958 = vunpack.c.l.b16 %v737
    %v959 = vunpack.c.h.b16 %v737
    %v960 = vunpack.c.l.b16 %v738
    %v961 = vunpack.c.h.b16 %v738
    %v962 = vunpack.c.l.b16 %v739
    %v963 = vunpack.c.h.b16 %v739
    %v964 = vunpack.c.l.b16 %v740
    %v965 = vunpack.c.h.b16 %v740
    %v966 = vpack.c.b16 %v818, %v816
    %v967 = vpack.c.b16 %v819, %v817
    %v968 = vpack.c.b16 %v822, %v820
    %v969 = vpack.c.b16 %v823, %v821
    %v970 = vpack.c.b16 %v826, %v824
    %v971 = vpack.c.b16 %v827, %v825
    %v972 = vpack.c.b16 %v830, %v828
    %v973 = vpack.c.b16 %v831, %v829
    %v974 = vpack.c.b16 %v834, %v832
    %v975 = vpack.c.b16 %v835, %v833
    %v976 = vpack.c.b16 %v838, %v836
    %v977 = vpack.c.b16 %v839, %v837
    %v978 = vpack.c.b16 %v842, %v840
    %v979 = vpack.c.b16 %v843, %v841
    %v980 = vpack.c.b16 %v846, %v844
    %v981 = vpack.c.b16 %v847, %v845
    %v982 = vpack.c.b16 %v850, %v848
    %v983 = vpack.c.b16 %v851, %v849
    %v984 = vpack.c.b16 %v854, %v852
    %v985 = vpack.c.b16 %v855, %v853
    %v986 = vpack.c.b16 %v858, %v856
    %v987 = vpack.c.b16 %v859, %v857
    %v988 = vpack.c.b16 %v862, %v860
    %v989 = vpack.c.b16 %v863, %v861
    %v990 = vpack.c.b16 %v866, %v864
    %v991 = vpack.c.b16 %v867, %v865
    %v992 = vpack.c.b16 %v870, %v868
    %v993 = vpack.c.b16 %v871, %v869
    %v994 = vpack.c.b16 %v874, %v872
    %v995 = vpack.c.b16 %v875, %v873
    %v996 = vpack.c.b16 %v878, %v876
    %v997 = vpack.c.b16 %v879, %v877
    %v998 = vpack.c.b16 %v882, %v880
    %v999 = vpack.c.b16 %v883, %v881
    %v1000 = vpack.c.b16 %v886, %v884
    %v1001 = vpack.c.b16 %v887, %v885
    %v1002 = vpack.c.b16 %v890, %v888
    %v1003 = vpack.c.b16 %v891, %v889
    %v1004 = vpack.c.b16 %v894, %v892
    %v1005 = vpack.c.b16 %v895, %v893
    %v1006 = vpack.c.b16 %v898, %v896
    %v1007 = vpack.c.b16 %v899, %v897
    %v1008 = vpack.c.b16 %v902, %v900
    %v1009 = vpack.c.b16 %v903, %v901
    %v1010 = vpack.c.b16 %v906, %v904
    %v1011 = vpack.c.b16 %v907, %v905
    %v1012 = vpack.c.b16 %v910, %v908
    %v1013 = vpack.c.b16 %v911, %v909
    %v1014 = vpack.c.b16 %v914, %v912
    %v1015 = vpack.c.b16 %v915, %v913
    %v1016 = vpack.c.b16 %v918, %v916
    %v1017 = vpack.c.b16 %v919, %v917
    %v1018 = vpack.c.b16 %v922, %v920
    %v1019 = vpack.c.b16 %v923, %v921
    %v1020 = vpack.c.b16 %v926, %v924
    %v1021 = vpack.c.b16 %v927, %v925
    %v1022 = vpack.c.b16 %v930, %v928
    %v1023 = vpack.c.b16 %v931, %v929
    %v1024 = vpack.c.b16 %v934, %v932
    %v1025 = vpack.c.b16 %v935, %v933
    %v1026 = vpack.c.b16 %v938, %v936
    %v1027 = vpack.c.b16 %v939, %v937
    %v1028 = vpack.c.b16 %v942, %v940
    %v1029 = vpack.c.b16 %v943, %v941
    %v1030 = vpack.c.b16 %v946, %v944
    %v1031 = vpack.c.b16 %v947, %v945
    %v1032 = vpack.c.b16 %v950, %v948
    %v1033 = vpack.c.b16 %v951, %v949
    %v1034 = vpack.c.b16 %v954, %v952
    %v1035 = vpack.c.b16 %v955, %v953
    %v1036 = vpack.c.b16 %v958, %v956
    %v1037 = vpack.c.b16 %v959, %v957
    %v1038 = vpack.c.b16 %v962, %v960
    %v1039 = vpack.c.b16 %v963, %v961
    %v1040 = vpack.c.b16 %v964, %v964
    %v1041 = vpack.c.b16 %v965, %v965
    %vm1116 = vcmask 719872
    %v1118 = vsel %vm1116, %v665, 0
    %v1121 = vsel %vm225, %v1040, 0
    %v1124 = vsel %vm225, %v1041, 0
    %1126 = vmatprep.subr.bf16.mxu0 %v967
    %1127 = vmatpush1.bf16.msra.mxu0 %v966
    %1128 = vmatprep.subr.bf16.mxu0 %v969
    %1129 = vmatpush1.bf16.msra.mxu0 %v968
    %1130 = vmatprep.subr.bf16.mxu0 %v971
    %1131 = vmatpush1.bf16.msra.mxu0 %v970
    %1132 = vmatprep.subr.bf16.mxu0 %v973
    %1133 = vmatpush1.bf16.msra.mxu0 %v972
    %1134 = vmatprep.subr.bf16.mxu0 %v975
    %1135 = vmatpush1.bf16.msra.mxu0 %v974
    %1136 = vmatprep.subr.bf16.mxu0 %v977
    %1137 = vmatpush1.bf16.msra.mxu0 %v976
    %1138 = vmatprep.subr.bf16.mxu0 %v979
    %1139 = vmatpush1.bf16.msra.mxu0 %v978
    %1140 = vmatprep.subr.bf16.mxu0 %v981
    %1141 = vmatpush1.bf16.msra.mxu0 %v980
    %1142 = vmatprep.subr.bf16.mxu0 %v983
    %1143 = vmatpush1.bf16.msra.mxu0 %v982
    %1144 = vmatprep.subr.bf16.mxu0 %v985
    %1145 = vmatpush1.bf16.msra.mxu0 %v984
    %1146 = vmatprep.subr.bf16.mxu0 %v987
    %1147 = vmatpush1.bf16.msra.mxu0 %v986
    %1148 = vmatprep.subr.bf16.mxu0 %v989
    %1149 = vmatpush1.bf16.msra.mxu0 %v988
    %1150 = vmatprep.subr.bf16.mxu0 %v991
    %1151 = vmatpush1.bf16.msra.mxu0 %v990
    %1152 = vmatprep.subr.bf16.mxu0 %v993
    %1153 = vmatpush1.bf16.msra.mxu0 %v992
    %1154 = vmatprep.subr.bf16.mxu0 %v995
    %1155 = vmatpush1.bf16.msra.mxu0 %v994
    %1156 = vmatprep.subr.bf16.mxu0 %v997
    %1157 = vmatpush1.bf16.msra.mxu0 %v996
    %1158 = vmatprep.mubr.bf16.mxu0 %v662
    %1159 = vmatmul.mubr.bf16.gmra.mrb[0].mxu0 %v661
    %v1160 = vpop.f32.mrb[0].mxu0
    %v1161 = vadd.f32 0.0, %v1160
    %v1162 = vpop.f32.mrb[0].mxu0
    %v1163 = vadd.f32 0.0, %v1162
    %v1164 = vpop.f32.mrb[0].mxu0
    %v1165 = vadd.f32 0.0, %v1164
    %v1166 = vpop.f32.mrb[0].mxu0
    %v1167 = vadd.f32 0.0, %v1166
    %1168 = vdwg.mxu0
    %1169 = vmatprep.subr.bf16.mxu0 %v999
    %1170 = vmatpush1.bf16.msra.mxu0 %v998
    %1171 = vmatprep.subr.bf16.mxu0 %v1001
    %1172 = vmatpush1.bf16.msra.mxu0 %v1000
    %1173 = vmatprep.subr.bf16.mxu0 %v1003
    %1174 = vmatpush1.bf16.msra.mxu0 %v1002
    %1175 = vmatprep.subr.bf16.mxu0 %v1005
    %1176 = vmatpush1.bf16.msra.mxu0 %v1004
    %1177 = vmatprep.subr.bf16.mxu0 %v1007
    %1178 = vmatpush1.bf16.msra.mxu0 %v1006
    %1179 = vmatprep.subr.bf16.mxu0 %v1009
    %1180 = vmatpush1.bf16.msra.mxu0 %v1008
    %1181 = vmatprep.subr.bf16.mxu0 %v1011
    %1182 = vmatpush1.bf16.msra.mxu0 %v1010
    %1183 = vmatprep.subr.bf16.mxu0 %v1013
    %1184 = vmatpush1.bf16.msra.mxu0 %v1012
    %1185 = vmatprep.subr.bf16.mxu0 %v1015
    %1186 = vmatpush1.bf16.msra.mxu0 %v1014
    %1187 = vmatprep.subr.bf16.mxu0 %v1017
    %1188 = vmatpush1.bf16.msra.mxu0 %v1016
    %1189 = vmatprep.subr.bf16.mxu0 %v1019
    %1190 = vmatpush1.bf16.msra.mxu0 %v1018
    %1191 = vmatprep.subr.bf16.mxu0 %v1021
    %1192 = vmatpush1.bf16.msra.mxu0 %v1020
    %1193 = vmatprep.subr.bf16.mxu0 %v1023
    %1194 = vmatpush1.bf16.msra.mxu0 %v1022
    %1195 = vmatprep.subr.bf16.mxu0 %v1025
    %1196 = vmatpush1.bf16.msra.mxu0 %v1024
    %1197 = vmatprep.subr.bf16.mxu0 %v1027
    %1198 = vmatpush1.bf16.msra.mxu0 %v1026
    %1199 = vmatprep.subr.bf16.mxu0 %v1029
    %1200 = vmatpush1.bf16.msra.mxu0 %v1028
    %1201 = vmatprep.mubr.bf16.mxu0 %v664
    %1202 = vmatmul.mubr.bf16.gmra.mrb[0].mxu0 %v663
    %v1203 = vpop.f32.mrb[0].mxu0
    %v1204 = vadd.f32 %v1161, %v1203
    %v1205 = vpop.f32.mrb[0].mxu0
    %v1206 = vadd.f32 %v1163, %v1205
    %v1207 = vpop.f32.mrb[0].mxu0
    %v1208 = vadd.f32 %v1165, %v1207
    %v1209 = vpop.f32.mrb[0].mxu0
    %v1210 = vadd.f32 %v1167, %v1209
    %1211 = vdwg.mxu0
    %1212 = vmatprep.subr.bf16.mxu0 %v1031
    %1213 = vmatpush1.bf16.msra.mxu0 %v1030
    %1214 = vmatprep.subr.bf16.mxu0 %v1033
    %1215 = vmatpush1.bf16.msra.mxu0 %v1032
    %1216 = vmatprep.subr.bf16.mxu0 %v1035
    %1217 = vmatpush1.bf16.msra.mxu0 %v1034
    %1218 = vmatprep.subr.bf16.mxu0 %v1037
    %1219 = vmatpush1.bf16.msra.mxu0 %v1036
    %1220 = vmatprep.subr.bf16.mxu0 %v1039
    %1221 = vmatpush1.bf16.msra.mxu0 %v1038
    %1222 = vmatprep.subr.bf16.mxu0 %v1124
    %1223 = vmatpush1.bf16.msra.mxu0 %v1121
    %1224 = vmatprep.subr.bf16.mxu0 0
    %1225 = vmatpush1.bf16.msra.mxu0 0
    %1226 = vmatprep.subr.bf16.mxu0 0
    %1227 = vmatpush1.bf16.msra.mxu0 0
    %1228 = vmatprep.subr.bf16.mxu0 0
    %1229 = vmatpush1.bf16.msra.mxu0 0
    %1230 = vmatprep.subr.bf16.mxu0 0
    %1231 = vmatpush1.bf16.msra.mxu0 0
    %1232 = vmatprep.subr.bf16.mxu0 0
    %1233 = vmatpush1.bf16.msra.mxu0 0
    %1234 = vmatprep.subr.bf16.mxu0 0
    %1235 = vmatpush1.bf16.msra.mxu0 0
    %1236 = vmatprep.subr.bf16.mxu0 0
    %1237 = vmatpush1.bf16.msra.mxu0 0
    %1238 = vmatprep.subr.bf16.mxu0 0
    %1239 = vmatpush1.bf16.msra.mxu0 0
    %1240 = vmatprep.subr.bf16.mxu0 0
    %1241 = vmatpush1.bf16.msra.mxu0 0
    %1242 = vmatprep.subr.bf16.mxu0 0
    %1243 = vmatpush1.bf16.msra.mxu0 0
    %1244 = vmatprep.mubr.bf16.mxu0 0
    %1245 = vmatmul.mubr.bf16.gmra.mrb[0].mxu0 %v1118
    %v1246 = vpop.f32.mrb[0].mxu0
    %v1247 = vadd.f32 %v1204, %v1246
    %v1248 = vpop.f32.mrb[0].mxu0
    %v1249 = vadd.f32 %v1206, %v1248
    %v1250 = vpop.f32.mrb[0].mxu0
    %v1251 = vadd.f32 %v1208, %v1250
    %v1252 = vpop.f32.mrb[0].mxu0
    %v1253 = vadd.f32 %v1210, %v1252
    %1254 = vdwg.mxu0
    %v1259 = vrot.slane %v1247, 4
    %v1260 = vrot.slane %v1249, 4
    %v1261 = vrot.slane %v1251, 4
    %v1262 = vrot.slane %v1253, 4
    %v1267 = vmax.f32 %v1247, %v1259
    %v1268 = vmax.f32 %v1249, %v1260
    %v1269 = vmax.f32 %v1251, %v1261
    %v1270 = vmax.f32 %v1253, %v1262
    %1275 = vrot.lane.b32.xlu0 %v1267, 48
    %v1276 = vpop.permute.xlu0 %1275
    %1277 = vrot.lane.b32.xlu0 %v1268, 48
    %v1278 = vpop.permute.xlu0 %1277
    %1279 = vrot.lane.b32.xlu0 %v1269, 48
    %v1280 = vpop.permute.xlu0 %1279
    %1281 = vrot.lane.b32.xlu0 %v1270, 48
    %v1282 = vpop.permute.xlu0 %1281
    %vm1283 = vcmask 392192
    %v1284 = vsel %vm1283, %v1276, %v1278
    %v1285 = vsel %vm1283, %v1280, %v1282
    %v1288 = vmax.f32 %v1267, %v1284
    %v1289 = vmax.f32 %v1269, %v1285
    %v1290 = vld [vmem:[%s4] sm:$0x1]
    %v1292 = vlaneseq
    %v1293 = vshrl.u32 %v1292, 7
    %v1294 = vsub.s32 0, %v1293
    %v1295 = vrot.slane %v1290, %v1294
    %v1297 = vadd.f32 %v1288, %v1295
    %v1298 = vadd.f32 %v1289, %v1295
    %v1299 = vmax.f32 %v1297, 0.0
    %v1300 = vmax.f32 %v1298, 0.0
    %v1303 = vrot.slane %v1300, 7
    %vm1304 = vcmask 1041409
    %v1305 = vsel %vm1304, %v1303, %v1299
    %v1307 = vrot.slane %v1299, 1
    %v1308 = vsel %vm1304, %v1300, %v1307
    %1309 = vrot.lane.b32.xlu0 %v1308, 80
    %v1310 = vpop.permute.xlu0 %1309
    %v1312 = vrot.slane %v1299, 2
    %v1313 = vrot.slane %v1300, 1
    %v1314 = vsel %vm1304, %v1313, %v1312
    %1315 = vrot.lane.b32.xlu0 %v1314, 32
    %v1316 = vpop.permute.xlu0 %1315
    %v1318 = vrot.slane %v1299, 3
    %v1319 = vrot.slane %v1300, 2
    %v1320 = vsel %vm1304, %v1319, %v1318
    %1321 = vrot.lane.b32.xlu0 %v1320, 112
    %v1322 = vpop.permute.xlu0 %1321
    %vm1324 = vcmask 654336
    %v1325 = vsel %vm1324, %v1305, %v1310
    %vm1326 = vcmask 261120
    %v1327 = vsel %vm1326, %v1310, %v1316
    %v1328 = vsel %vm85, %v1327, %v1322
    %v1329 = vpack.c.bf16 %v1325, %v1325
    %v1330 = vpack.c.bf16 %v1328, %v1328
    %v1331 = vpack.c.bf16 %v1322, %v1322
    %v1332 = vld [vmem:[%s5] sm:$0xf]
    %v1333 = vld [vmem:[%s5 + $0x4] sm:$0xf]
    %v1334 = vld [vmem:[%s5 + $0x8] sm:$0xf]
    %v1335 = vld [vmem:[%s5 + $0xc] sm:$0xf]
    %v1336 = vld [vmem:[%s5 + $0x10] sm:$0xf]
    %v1337 = vld [vmem:[%s5 + $0x14] sm:$0xf]
    %v1338 = vld [vmem:[%s5 + $0x18] sm:$0xf]
    %v1339 = vld [vmem:[%s5 + $0x1c] sm:$0xf]
    %v1340 = vld [vmem:[%s5 + $0x20] sm:$0xf]
    %v1341 = vld [vmem:[%s5 + $0x24] sm:$0xf]
    %v1342 = vld [vmem:[%s5 + $0x28] sm:$0xf]
    %v1343 = vld [vmem:[%s5 + $0x2c] sm:$0xf]
    %v1344 = vld [vmem:[%s5 + $0x30] sm:$0xf]
    %v1345 = vld [vmem:[%s5 + $0x34] sm:$0xf]
    %v1346 = vld [vmem:[%s5 + $0x38] sm:$0xf]
    %v1347 = vld [vmem:[%s5 + $0x3c] sm:$0xf]
    %v1348 = vld [vmem:[%s5 + $0x40] sm:$0xf]
    %v1349 = vld [vmem:[%s5 + $0x44] sm:$0xf]
    %v1350 = vld [vmem:[%s5 + $0x48] sm:$0xf]
    %v1351 = vld [vmem:[%s5 + $0x4c] sm:$0xf]
    %v1352 = vld [vmem:[%s5 + $0x50] sm:$0xf]
    %v1353 = vld [vmem:[%s5 + $0x54] sm:$0xf]
    %v1354 = vld [vmem:[%s5 + $0x58] sm:$0xf]
    %v1355 = vld [vmem:[%s5 + $0x5c] sm:$0xf]
    %v1356 = vld [vmem:[%s5 + $0x60] sm:$0xf]
    %v1357 = vld [vmem:[%s5 + $0x64] sm:$0xf]
    %v1358 = vld [vmem:[%s5 + $0x68] sm:$0xf]
    %v1359 = vld [vmem:[%s5 + $0x6c] sm:$0xf]
    %v1360 = vld [vmem:[%s5 + $0x70] sm:$0xf]
    %v1361 = vld [vmem:[%s5 + $0x74] sm:$0xf]
    %v1362 = vld [vmem:[%s5 + $0x78] sm:$0xf]
    %v1363 = vld [vmem:[%s5 + $0x7c] sm:$0xf]
    %v1364 = vld [vmem:[%s5 + $0x80] sm:$0xf]
    %v1365 = vld [vmem:[%s5 + $0x84] sm:$0xf]
    %v1366 = vld [vmem:[%s5 + $0x88] sm:$0xf]
    %v1367 = vld [vmem:[%s5 + $0x8c] sm:$0xf]
    %v1368 = vld [vmem:[%s5 + $0x90] sm:$0xf]
    %v1369 = vld [vmem:[%s5 + $0x94] sm:$0xf]
    %v1370 = vld [vmem:[%s5 + $0x98] sm:$0xf]
    %v1371 = vld [vmem:[%s5 + $0x9c] sm:$0xf]
    %v1372 = vld [vmem:[%s6] sm:$0x1]
    %v1374 = vlaneseq
    %v1375 = vshrl.u32 %v1374, 7
    %v1376 = vsub.s32 0, %v1375
    %v1377 = vrot.slane %v1372, %v1376
    %v1419 = vunpack.c.l.b16 %v1332
    %v1420 = vunpack.c.l.b16 %v1333
    %v1421 = vunpack.c.l.b16 %v1334
    %v1422 = vunpack.c.l.b16 %v1335
    %v1423 = vunpack.c.l.b16 %v1336
    %v1424 = vunpack.c.l.b16 %v1337
    %v1425 = vunpack.c.l.b16 %v1338
    %v1426 = vunpack.c.l.b16 %v1339
    %v1427 = vunpack.c.l.b16 %v1340
    %v1428 = vunpack.c.l.b16 %v1341
    %v1429 = vunpack.c.l.b16 %v1342
    %v1430 = vunpack.c.l.b16 %v1343
    %v1431 = vunpack.c.l.b16 %v1344
    %v1432 = vunpack.c.l.b16 %v1345
    %v1433 = vunpack.c.l.b16 %v1346
    %v1434 = vunpack.c.l.b16 %v1347
    %v1435 = vunpack.c.l.b16 %v1348
    %v1436 = vunpack.c.l.b16 %v1349
    %v1437 = vunpack.c.l.b16 %v1350
    %v1438 = vunpack.c.l.b16 %v1351
    %v1439 = vunpack.c.l.b16 %v1352
    %v1440 = vunpack.c.l.b16 %v1353
    %v1441 = vunpack.c.l.b16 %v1354
    %v1442 = vunpack.c.l.b16 %v1355
    %v1443 = vunpack.c.l.b16 %v1356
    %v1444 = vunpack.c.l.b16 %v1357
    %v1445 = vunpack.c.l.b16 %v1358
    %v1446 = vunpack.c.l.b16 %v1359
    %v1447 = vunpack.c.l.b16 %v1360
    %v1448 = vunpack.c.l.b16 %v1361
    %v1449 = vunpack.c.l.b16 %v1362
    %v1450 = vunpack.c.l.b16 %v1363
    %v1451 = vunpack.c.l.b16 %v1364
    %v1452 = vunpack.c.l.b16 %v1365
    %v1453 = vunpack.c.l.b16 %v1366
    %v1454 = vunpack.c.l.b16 %v1367
    %v1455 = vunpack.c.l.b16 %v1368
    %v1456 = vunpack.c.l.b16 %v1369
    %v1457 = vunpack.c.l.b16 %v1370
    %v1458 = vunpack.c.l.b16 %v1371
    %v1459 = vpack.c.b16 %v1420, %v1419
    %v1460 = vpack.c.b16 %v1422, %v1421
    %v1461 = vpack.c.b16 %v1424, %v1423
    %v1462 = vpack.c.b16 %v1426, %v1425
    %v1463 = vpack.c.b16 %v1428, %v1427
    %v1464 = vpack.c.b16 %v1430, %v1429
    %v1465 = vpack.c.b16 %v1432, %v1431
    %v1466 = vpack.c.b16 %v1434, %v1433
    %v1467 = vpack.c.b16 %v1436, %v1435
    %v1468 = vpack.c.b16 %v1438, %v1437
    %v1469 = vpack.c.b16 %v1440, %v1439
    %v1470 = vpack.c.b16 %v1442, %v1441
    %v1471 = vpack.c.b16 %v1444, %v1443
    %v1472 = vpack.c.b16 %v1446, %v1445
    %v1473 = vpack.c.b16 %v1448, %v1447
    %v1474 = vpack.c.b16 %v1450, %v1449
    %v1475 = vpack.c.b16 %v1452, %v1451
    %v1476 = vpack.c.b16 %v1454, %v1453
    %v1477 = vpack.c.b16 %v1456, %v1455
    %v1478 = vpack.c.b16 %v1458, %v1457
    %vm1499 = vcmask 523264
    %v1501 = vsel %vm1499, %v1331, 0
    %1503 = vmatprep.subr.bf16.mxu0 0
    %1504 = vmatpush1.bf16.msra.mxu0 %v1459
    %1505 = vmatprep.subr.bf16.mxu0 0
    %1506 = vmatpush1.bf16.msra.mxu0 %v1460
    %1507 = vmatprep.subr.bf16.mxu0 0
    %1508 = vmatpush1.bf16.msra.mxu0 %v1461
    %1509 = vmatprep.subr.bf16.mxu0 0
    %1510 = vmatpush1.bf16.msra.mxu0 %v1462
    %1511 = vmatprep.subr.bf16.mxu0 0
    %1512 = vmatpush1.bf16.msra.mxu0 %v1463
    %1513 = vmatprep.subr.bf16.mxu0 0
    %1514 = vmatpush1.bf16.msra.mxu0 %v1464
    %1515 = vmatprep.subr.bf16.mxu0 0
    %1516 = vmatpush1.bf16.msra.mxu0 %v1465
    %1517 = vmatprep.subr.bf16.mxu0 0
    %1518 = vmatpush1.bf16.msra.mxu0 %v1466
    %1519 = vmatprep.subr.bf16.mxu0 0
    %1520 = vmatpush1.bf16.msra.mxu0 %v1467
    %1521 = vmatprep.subr.bf16.mxu0 0
    %1522 = vmatpush1.bf16.msra.mxu0 %v1468
    %1523 = vmatprep.subr.bf16.mxu0 0
    %1524 = vmatpush1.bf16.msra.mxu0 %v1469
    %1525 = vmatprep.subr.bf16.mxu0 0
    %1526 = vmatpush1.bf16.msra.mxu0 %v1470
    %1527 = vmatprep.subr.bf16.mxu0 0
    %1528 = vmatpush1.bf16.msra.mxu0 %v1471
    %1529 = vmatprep.subr.bf16.mxu0 0
    %1530 = vmatpush1.bf16.msra.mxu0 %v1472
    %1531 = vmatprep.subr.bf16.mxu0 0
    %1532 = vmatpush1.bf16.msra.mxu0 %v1473
    %1533 = vmatprep.subr.bf16.mxu0 0
    %1534 = vmatpush1.bf16.msra.mxu0 %v1474
    %1535 = vmatprep.mubr.bf16.mxu0 %v1330
    %1536 = vmatmul.mubr.bf16.gmra.mrb[0].mxu0 %v1329
    %v1537 = vpop.f32.mrb[0].mxu0
    %v1538 = vadd.f32 %v1377, %v1537
    %v1539 = vpop.f32.mrb[0].mxu0
    %v1540 = vpop.f32.mrb[0].mxu0
    %v1541 = vpop.f32.mrb[0].mxu0
    %1542 = vdwg.mxu0
    %1543 = vmatprep.subr.bf16.mxu0 0
    %1544 = vmatpush1.bf16.msra.mxu0 %v1475
    %1545 = vmatprep.subr.bf16.mxu0 0
    %1546 = vmatpush1.bf16.msra.mxu0 %v1476
    %1547 = vmatprep.subr.bf16.mxu0 0
    %1548 = vmatpush1.bf16.msra.mxu0 %v1477
    %1549 = vmatprep.subr.bf16.mxu0 0
    %1550 = vmatpush1.bf16.msra.mxu0 %v1478
    %1551 = vmatprep.subr.bf16.mxu0 0
    %1552 = vmatpush1.bf16.msra.mxu0 0
    %1553 = vmatprep.subr.bf16.mxu0 0
    %1554 = vmatpush1.bf16.msra.mxu0 0
    %1555 = vmatprep.subr.bf16.mxu0 0
    %1556 = vmatpush1.bf16.msra.mxu0 0
    %1557 = vmatprep.subr.bf16.mxu0 0
    %1558 = vmatpush1.bf16.msra.mxu0 0
    %1559 = vmatprep.subr.bf16.mxu0 0
    %1560 = vmatpush1.bf16.msra.mxu0 0
    %1561 = vmatprep.subr.bf16.mxu0 0
    %1562 = vmatpush1.bf16.msra.mxu0 0
    %1563 = vmatprep.subr.bf16.mxu0 0
    %1564 = vmatpush1.bf16.msra.mxu0 0
    %1565 = vmatprep.subr.bf16.mxu0 0
    %1566 = vmatpush1.bf16.msra.mxu0 0
    %1567 = vmatprep.subr.bf16.mxu0 0
    %1568 = vmatpush1.bf16.msra.mxu0 0
    %1569 = vmatprep.subr.bf16.mxu0 0
    %1570 = vmatpush1.bf16.msra.mxu0 0
    %1571 = vmatprep.subr.bf16.mxu0 0
    %1572 = vmatpush1.bf16.msra.mxu0 0
    %1573 = vmatprep.subr.bf16.mxu0 0
    %1574 = vmatpush1.bf16.msra.mxu0 0
    %1575 = vmatprep.mubr.bf16.mxu0 0
    %1576 = vmatmul.mubr.bf16.gmra.mrb[0].mxu0 %v1501
    %v1577 = vpop.f32.mrb[0].mxu0
    %v1578 = vadd.f32 %v1538, %v1577
    %v1579 = vpop.f32.mrb[0].mxu0
    %v1580 = vpop.f32.mrb[0].mxu0
    %v1581 = vpop.f32.mrb[0].mxu0
    %1582 = vdwg.mxu0
    %v1583 = vmax.f32 %v1578, 0.0
    %v1584 = vpack.c.bf16 %v1583, %v1583
    %v1585 = vld [vmem:[%s7] sm:$0xf]
    %v1586 = vld [vmem:[%s7 + $0x4] sm:$0xf]
    %v1587 = vld [vmem:[%s7 + $0x8] sm:$0xf]
    %v1588 = vld [vmem:[%s7 + $0xc] sm:$0xf]
    %v1589 = vld [vmem:[%s7 + $0x10] sm:$0xf]
    %v1590 = vld [vmem:[%s7 + $0x14] sm:$0xf]
    %v1591 = vld [vmem:[%s7 + $0x18] sm:$0x1]
    %v1592 = vld [vmem:[%s8] sm:$0x1]
    %v1594 = vlaneseq
    %v1595 = vshrl.u32 %v1594, 7
    %v1596 = vsub.s32 0, %v1595
    %v1597 = vrot.slane %v1592, %v1596
    %v1606 = vunpack.c.l.b16 %v1585
    %v1607 = vunpack.c.l.b16 %v1586
    %v1608 = vunpack.c.l.b16 %v1587
    %v1609 = vunpack.c.l.b16 %v1588
    %v1610 = vunpack.c.l.b16 %v1589
    %v1611 = vunpack.c.l.b16 %v1590
    %v1612 = vunpack.c.l.b16 %v1591
    %v1613 = vpack.c.b16 %v1607, %v1606
    %v1614 = vpack.c.b16 %v1609, %v1608
    %v1615 = vpack.c.b16 %v1611, %v1610
    %v1616 = vpack.c.b16 %v1612, %v1612
    %vm1620 = vcmask 408576
    %v1622 = vsel %vm1620, %v1584, 0
    %vm1624 = vcmask 1040384
    %v1626 = vsel %vm1624, %v1616, 0
    %1628 = vmatprep.subr.bf16.mxu0 0
    %1629 = vmatpush1.bf16.msra.mxu0 %v1613
    %1630 = vmatprep.subr.bf16.mxu0 0
    %1631 = vmatpush1.bf16.msra.mxu0 %v1614
    %1632 = vmatprep.subr.bf16.mxu0 0
    %1633 = vmatpush1.bf16.msra.mxu0 %v1615
    %1634 = vmatprep.subr.bf16.mxu0 0
    %1635 = vmatpush1.bf16.msra.mxu0 %v1626
    %1636 = vmatprep.subr.bf16.mxu0 0
    %1637 = vmatpush1.bf16.msra.mxu0 0
    %1638 = vmatprep.subr.bf16.mxu0 0
    %1639 = vmatpush1.bf16.msra.mxu0 0
    %1640 = vmatprep.subr.bf16.mxu0 0
    %1641 = vmatpush1.bf16.msra.mxu0 0
    %1642 = vmatprep.subr.bf16.mxu0 0
    %1643 = vmatpush1.bf16.msra.mxu0 0
    %1644 = vmatprep.subr.bf16.mxu0 0
    %1645 = vmatpush1.bf16.msra.mxu0 0
    %1646 = vmatprep.subr.bf16.mxu0 0
    %1647 = vmatpush1.bf16.msra.mxu0 0
    %1648 = vmatprep.subr.bf16.mxu0 0
    %1649 = vmatpush1.bf16.msra.mxu0 0
    %1650 = vmatprep.subr.bf16.mxu0 0
    %1651 = vmatpush1.bf16.msra.mxu0 0
    %1652 = vmatprep.subr.bf16.mxu0 0
    %1653 = vmatpush1.bf16.msra.mxu0 0
    %1654 = vmatprep.subr.bf16.mxu0 0
    %1655 = vmatpush1.bf16.msra.mxu0 0
    %1656 = vmatprep.subr.bf16.mxu0 0
    %1657 = vmatpush1.bf16.msra.mxu0 0
    %1658 = vmatprep.subr.bf16.mxu0 0
    %1659 = vmatpush1.bf16.msra.mxu0 0
    %1660 = vmatprep.mubr.bf16.mxu0 0
    %1661 = vmatmul.mubr.bf16.gmra.mrb[0].mxu0 %v1622
    %v1662 = vpop.f32.mrb[0].mxu0
    %v1663 = vadd.f32 %v1597, %v1662
    %v1664 = vpop.f32.mrb[0].mxu0
    %v1665 = vpop.f32.mrb[0].mxu0
    %v1666 = vpop.f32.mrb[0].mxu0
    %1667 = vdwg.mxu0
    %vm1668 = vcmask 74752
    %v1669 = vsel %vm1668, %v1663, -inf
    %1670 = vmax.xlane.f32.xlu0 %v1669
    %v1671 = vpop.xlane.xlu0 %1670
    %v1672 = vsub.f32 %v1663, %v1671
    %v1673 = vmul.f32 %v1672, 1.442695
    %v1674 = vpow.pop %v1673
    %v1675 = vsel %vm1668, %v1674, 0.0
    %1676 = vadd.xlane.f32.xlu0 %v1675
    %v1677 = vpop.xlane.xlu0 %1676
    %v1678 = vlog2.pop %v1677
    %v1679 = vmul.f32 %v1678, 0.6931472
    %v1680 = vadd.f32 %v1679, %v1671
    %v1681 = vsub.f32 %v1663, %v1680
    %1682 = vst.msk [vmem:[#allocation2] sm:$0x3] %vm1668, %v1681
    // Predicated region
    $region38: #{convnet_forward.1} parent=1 // pred_check
      _
    $region39: #{convnet_forward.1} parent=1 // pred_check_branch
      %1684 = sbr.rel (0) target = $region41
    $region40: #{convnet_forward.1} parent=1 // pred_region
      %s1686 = ssub.s32 32, 32
      %1687 = vsyncadd [#allocation3], %s1686
      %s1689 = sshll.u32 [#allocation2], 4
      %s1690 = int_to_ptr.vmem [resolvable:$true] %s1689
      %1692 = dma.vmem_to_hbm [thread:$0]  %s1690, 32, %s9, [#allocation3]
    $region41: #{convnet_forward.1} parent=1 // pred_fallthru
      _
    // Predicated region
    $region42: #{convnet_forward.1} parent=1 // pred_check
      _
    $region43: #{convnet_forward.1} parent=1 // pred_check_branch
      %1694 = sbr.rel (0) target = $region45
    $region44: #{convnet_forward.1} parent=1 // pred_region
      %1695 = dma.done [#allocation3], 32
    $region45: #{convnet_forward.1} parent=1 // pred_fallthru
      _
    %1696 = vsyncpa [#allocation3], 1

</llo_original>
